<compile_context>
chip_gen: v6e
topology: v6e:2x2x1
jax: 0.10.0
libtpu: 0.0.40
codegen_flags: <defaults>
</compile_context>

<pallas_src>
import numpy as np
import jax
import jax.numpy as jnp
from jax.experimental import pallas as pl
from jax.experimental.pallas import tpu as pltpu

LANE = 128  # TPU lane width; head outputs are padded to this for unmasked stores.


# ------------------------------ fused kernel --------------------------------

def _fused_kernel(ids_ref, mask_ref, emb_ref, encw_ref, encb_ref,
                  hw_ref, hb_ref, o_ref):
    """embedding gather -> dense+tanh -> masked-mean pool -> packed heads.

    Everything for one batch tile stays in VMEM/vregs; the only HBM traffic is
    the small inputs/weights in and one lane-dense [TB, 128] logits store out.
    """
    TB, L = ids_ref.shape
    V, H = emb_ref.shape
    R = TB * L

    # --- embedding lookup as a one-hot matmul on the MXU (vocab table is tiny
    #     and resident in VMEM; avoids a separate XLA gather + HBM round trip).
    ids3 = ids_ref[...][:, :, None]                                    # [TB, L, 1] i32
    viota = jax.lax.broadcasted_iota(jnp.int32, (TB, L, V), 2)         # [TB, L, V]
    onehot = jnp.where(ids3 == viota, 1.0, 0.0).astype(jnp.bfloat16)   # [TB, L, V]
    onehot2 = onehot.reshape(R, V)                                     # merge leading dims (layout no-op)
    emb = jnp.dot(onehot2, emb_ref[...],
                  preferred_element_type=jnp.float32)                  # [R, H] (exact bf16 rows)

    # --- encoder dense + tanh: bf16 MXU inputs, f32 accumulation, f32 epilogue
    #     (tanh / bias kept in f32 -- v5e has no bf16 VPU/EUP path anyway).
    pre = jnp.dot(emb.astype(jnp.bfloat16), encw_ref[...],
                  preferred_element_type=jnp.float32) + encb_ref[...]  # [R, H] f32
    h = jnp.tanh(pre)                                                  # f32 (EUP)

    # --- masked-mean readout as an MXU contraction (no [B, L, 1] VPU
    #     broadcast + sublane reduce); clamp matches torch.clamp(min=1e-9).
    m = mask_ref[...].astype(jnp.float32)                              # [TB, L]
    h3 = h.reshape(TB, L, H)                                           # split leading dim (layout no-op)
    num = jnp.einsum('bql,blh->bqh', m[:, None, :], h3,
                     preferred_element_type=jnp.float32)[:, 0, :]      # [TB, H]
    den = jnp.maximum(jnp.sum(m, axis=1, keepdims=True), 1e-9)         # [TB, 1]
    pooled = num / den                                                 # [TB, H] f32

    # --- all heads at once: weights packed+padded to [H, 128] so the store is
    #     lane-dense (unmasked vst) and there is one matmul for every head.
    logits = jnp.dot(pooled.astype(jnp.bfloat16), hw_ref[...],
                     preferred_element_type=jnp.float32) + hb_ref[...]  # [TB, 128]
    o_ref[...] = logits


# -------------------------------- wrapper ------------------------------------

def fused_forward(params, input_ids, attention_mask, *, batch_tile=8):
    """Single pallas_call: LanguageModel._lm_forward (readout='mean') fused with
    the packed multi-head linear.  Returns padded logits [B, CPAD] (f32)."""
    B, L = input_ids.shape
    V, H = params["embedding"].shape
    CPAD = params["head_w_packed"].shape[1]
    TB = min(batch_tile, B)
    assert B % TB == 0 and TB % 8 == 0 and L % 8 == 0, "tiling constraints"

    flops = (2 * B * L * V * H          # one-hot embedding matmul
             + 2 * B * L * H * H        # encoder dense
             + 2 * B * L * H            # masked-mean contraction
             + 2 * B * H * CPAD)        # packed heads
    bytes_accessed = (input_ids.size * 4 + attention_mask.size * 4
                      + V * H * 2 + H * H * 2 + H * 4
                      + H * CPAD * 2 + CPAD * 4 + B * CPAD * 4)
    cost = pl.CostEstimate(flops=flops, transcendentals=B * L * H,
                           bytes_accessed=bytes_accessed)

    # NOTE on scaling (not exercised at toy sizes): for realistic H/L grow the
    # grid over (rows, hidden-out, hidden-in) with an f32 accumulator and pick
    # 256-multiple tiles on v6e/v7x (256x256 MXU); halve the tile footprint on
    # v7x (64 MiB VMEM per TC).
    return pl.pallas_call(
        _fused_kernel,
        out_shape=jax.ShapeDtypeStruct((B, CPAD), jnp.float32),
        grid=(B // TB,),
        in_specs=[
            pl.BlockSpec((TB, L), lambda i: (i, 0)),     # input_ids (i32)
            pl.BlockSpec((TB, L), lambda i: (i, 0)),     # attention_mask (i32)
            pl.BlockSpec((V, H), lambda i: (0, 0)),      # embedding table (bf16)
            pl.BlockSpec((H, H), lambda i: (0, 0)),      # encoder weight (bf16)
            pl.BlockSpec((1, H), lambda i: (0, 0)),      # encoder bias (f32)
            pl.BlockSpec((H, CPAD), lambda i: (0, 0)),   # packed head weights (bf16)
            pl.BlockSpec((1, CPAD), lambda i: (0, 0)),   # packed head bias (f32)
        ],
        out_specs=pl.BlockSpec((TB, CPAD), lambda i: (i, 0)),
        compiler_params=pltpu.CompilerParams(
            # batch-tile axis is embarrassingly parallel -> lets v7x shard the
            # grid across its 2 TensorCores; harmless on v5e/v6e.
            dimension_semantics=("parallel",),
            vmem_limit_bytes=32 * 1024 * 1024,
        ),
        cost_estimate=cost,
    )(input_ids, attention_mask, params["embedding"], params["enc_w"],
      params["enc_b"], params["head_w_packed"], params["head_b_packed"])


# ------------------------- parameters + model glue ---------------------------

def init_params(key, vocab_size, hidden_size, num_classes):
    keys = jax.random.split(key, 3 + 2 * len(num_classes))
    embedding = jax.random.normal(keys[0], (vocab_size, hidden_size),
                                  jnp.float32) * 0.02
    enc_w = jax.random.normal(keys[1], (hidden_size, hidden_size),
                              jnp.float32) / np.sqrt(hidden_size)
    enc_b = jax.random.normal(keys[2], (1, hidden_size), jnp.float32) * 0.01

    # Per-head nn.Linear params (torch weight is [C, H]); packed into a single
    # [H, sum(C)] matmul and zero-padded to a multiple of 128 output lanes.
    head_ws, head_bs = [], []
    for idx, c in enumerate(num_classes):
        w = jax.random.normal(keys[3 + 2 * idx], (c, hidden_size),
                              jnp.float32) / np.sqrt(hidden_size)
        b = jax.random.normal(keys[4 + 2 * idx], (1, c), jnp.float32) * 0.01
        head_ws.append(jnp.transpose(w))   # [H, C]
        head_bs.append(b)                  # [1, C]
    total_c = int(sum(num_classes))
    cpad = LANE * ((total_c + LANE - 1) // LANE)
    w_packed = jnp.zeros((hidden_size, cpad), jnp.float32).at[
        :, :total_c].set(jnp.concatenate(head_ws, axis=1))
    b_packed = jnp.zeros((1, cpad), jnp.float32).at[
        :, :total_c].set(jnp.concatenate(head_bs, axis=1))
    offsets = np.concatenate([[0], np.cumsum(num_classes)[:-1]])

    return {
        # bf16 MXU operands (f32 accumulation in-kernel); biases stay f32.
        "embedding": embedding.astype(jnp.bfloat16),
        "enc_w": enc_w.astype(jnp.bfloat16),
        "enc_b": enc_b,
        "head_w_packed": w_packed.astype(jnp.bfloat16),
        "head_b_packed": b_packed,
        "head_offsets": [int(o) for o in offsets],
        "head_sizes": [int(c) for c in num_classes],
    }


def multi_head_forward(params, input_tokens, input_head_indices,
                       class_tokens=None, class_head_indices=None):
    """MultiHeadLanguageModel.forward (class_tokens/class_head_indices unused,
    matching the reference).  All device work is a single fused pallas_call;
    the per-head dict (variable row counts -> shape-dynamic, exactly like the
    PyTorch reference) is assembled with cheap host-side slicing."""
    logits_all = fused_forward(params,
                               input_tokens["input_ids"],
                               input_tokens["attention_mask"])   # [B, CPAD]
    idx_np = np.asarray(input_head_indices)
    final_preds = {}
    for i in np.unique(idx_np):
        rows = np.where(idx_np == i)[0]
        off = params["head_offsets"][int(i)]
        c = params["head_sizes"][int(i)]
        final_preds[int(i)] = logits_all[rows, off:off + c]
    return final_preds


# ------------------------- pure-jnp numerical reference ----------------------

def _reference_padded_logits(params, input_ids, attention_mask):
    B, L = input_ids.shape
    H = params["enc_w"].shape[0]
    hi = jax.lax.Precision.HIGHEST
    emb = jnp.take(params["embedding"].astype(jnp.float32), input_ids,
                   axis=0).reshape(B * L, H)
    pre = jnp.dot(emb, params["enc_w"].astype(jnp.float32),
                  precision=hi) + params["enc_b"]
    h = jnp.tanh(pre).reshape(B, L, H)
    m = attention_mask.astype(jnp.float32)
    num = jnp.einsum('bl,blh->bh', m, h, precision=hi)
    den = jnp.maximum(jnp.sum(m, axis=1, keepdims=True), 1e-9)
    pooled = (num / den).astype(jnp.bfloat16).astype(jnp.float32)
    return jnp.dot(pooled, params["head_w_packed"].astype(jnp.float32),
                   precision=hi) + params["head_b_packed"]


# ----------------------------------- main ------------------------------------

if __name__ == "__main__":
    B, L, H = 16, 16, 128           # small, lane/sublane aligned
    VOCAB = 32
    NUM_CLASSES = [4, 6, 8]

    key = jax.random.PRNGKey(0)
    k_par, k_ids, k_mlen, k_hidx = jax.random.split(key, 4)

    params = init_params(k_par, VOCAB, H, NUM_CLASSES)

    input_ids = jax.random.randint(k_ids, (B, L), 0, VOCAB, dtype=jnp.int32)
    lengths = jax.random.randint(k_mlen, (B,), 4, L + 1, dtype=jnp.int32)
    attention_mask = (jnp.arange(L)[None, :] < lengths[:, None]).astype(jnp.int32)
    input_tokens = {"input_ids": input_ids, "attention_mask": attention_mask}
    input_head_indices = jax.random.randint(k_hidx, (B,), 0, len(NUM_CLASSES),
                                            dtype=jnp.int32)

    preds = multi_head_forward(params, input_tokens, input_head_indices,
                               class_tokens=None, class_head_indices=None)

    # shape checks against the reference semantics
    idx_np = np.asarray(input_head_indices)
    for i, v in preds.items():
        jax.block_until_ready(v)
        assert v.shape == (int(np.sum(idx_np == i)), NUM_CLASSES[i])

    # numerical check of the fused kernel against a pure-jnp reference
    got = np.asarray(fused_forward(params, input_ids, attention_mask))
    want = np.asarray(_reference_padded_logits(params, input_ids, attention_mask))
    np.testing.assert_allclose(got, want, rtol=2e-2, atol=2e-2)

    print("KERNEL_OK")
</pallas_src>

<mosaic_0001>
module attributes {stable_mosaic.version = 11 : i64} {
  func.func @_fused_kernel(%arg0: i32, %arg1: memref<8x16xi32, #tpu.memory_space<vmem>>, %arg2: memref<8x16xi32, #tpu.memory_space<vmem>>, %arg3: memref<32x128xbf16, #tpu.memory_space<vmem>>, %arg4: memref<128x128xbf16, #tpu.memory_space<vmem>>, %arg5: memref<1x128xf32, #tpu.memory_space<vmem>>, %arg6: memref<128x128xbf16, #tpu.memory_space<vmem>>, %arg7: memref<1x128xf32, #tpu.memory_space<vmem>>, %arg8: memref<8x128xf32, #tpu.memory_space<vmem>>) attributes {dimension_semantics = [#tpu.dimension_semantics<parallel>], iteration_bounds = array<i64: 2>, scalar_prefetch = 0 : i64, scratch_operands = 0 : i64, tpu.core_type = #tpu.core_type<tc>, window_params = [{transform_indices = @transform_0, window_bounds = array<i64: 8, 16>}, {transform_indices = @transform_1, window_bounds = array<i64: 8, 16>}, {pipeline_mode = #tpu.pipeline_mode<synchronous>, transform_indices = @transform_2, window_bounds = array<i64: 32, 128>}, {pipeline_mode = #tpu.pipeline_mode<synchronous>, transform_indices = @transform_3, window_bounds = array<i64: 128, 128>}, {pipeline_mode = #tpu.pipeline_mode<synchronous>, transform_indices = @transform_4, window_bounds = array<i64: 1, 128>}, {pipeline_mode = #tpu.pipeline_mode<synchronous>, transform_indices = @transform_5, window_bounds = array<i64: 128, 128>}, {pipeline_mode = #tpu.pipeline_mode<synchronous>, transform_indices = @transform_6, window_bounds = array<i64: 1, 128>}, {transform_indices = @transform_7, window_bounds = array<i64: 8, 128>}]} {
    %c0 = arith.constant 0 : index
    %c0_0 = arith.constant 0 : index
    %0 = vector.load %arg1[%c0, %c0_0] : memref<8x16xi32, #tpu.memory_space<vmem>>, vector<8x16xi32>
    %1 = vector.shape_cast %0 : vector<8x16xi32> to vector<8x16x1xi32>
    %2 = tpu.iota {dimensions = array<i32: 2>} : vector<8x16x32xi32>
    %3 = vector.broadcast %1 : vector<8x16x1xi32> to vector<8x16x32xi32>
    %4 = arith.cmpi eq, %3, %2 : vector<8x16x32xi32>
    %cst = arith.constant 1.000000e+00 : f32
    %cst_1 = arith.constant 0.000000e+00 : f32
    %5 = vector.broadcast %cst : f32 to vector<8x16x32xf32>
    %6 = vector.broadcast %cst_1 : f32 to vector<8x16x32xf32>
    %7 = arith.select %4, %5, %6 : vector<8x16x32xi1>, vector<8x16x32xf32>
    %8 = arith.truncf %7 : vector<8x16x32xf32> to vector<8x16x32xbf16>
    %9 = vector.shape_cast %8 : vector<8x16x32xbf16> to vector<128x32xbf16>
    %c0_2 = arith.constant 0 : index
    %c0_3 = arith.constant 0 : index
    %10 = vector.load %arg3[%c0_2, %c0_3] : memref<32x128xbf16, #tpu.memory_space<vmem>>, vector<32x128xbf16>
    %cst_4 = arith.constant dense<0.000000e+00> : vector<128x128xf32>
    %11 = tpu.matmul %9, %10, %cst_4 {dimension_numbers = #tpu.dot_dimension_numbers<[1], [0], [0], [1], [0, 0, 1, 1], [], []>} : vector<128x32xbf16>, vector<32x128xbf16>, vector<128x128xf32> -> vector<128x128xf32>
    %12 = arith.truncf %11 : vector<128x128xf32> to vector<128x128xbf16>
    %c0_5 = arith.constant 0 : index
    %c0_6 = arith.constant 0 : index
    %13 = vector.load %arg4[%c0_5, %c0_6] : memref<128x128xbf16, #tpu.memory_space<vmem>>, vector<128x128xbf16>
    %cst_7 = arith.constant dense<0.000000e+00> : vector<128x128xf32>
    %14 = tpu.matmul %12, %13, %cst_7 {dimension_numbers = #tpu.dot_dimension_numbers<[1], [0], [0], [1], [0, 0, 1, 1], [], []>} : vector<128x128xbf16>, vector<128x128xbf16>, vector<128x128xf32> -> vector<128x128xf32>
    %c0_8 = arith.constant 0 : index
    %c0_9 = arith.constant 0 : index
    %15 = vector.load %arg5[%c0_8, %c0_9] : memref<1x128xf32, #tpu.memory_space<vmem>>, vector<1x128xf32>
    %16 = vector.broadcast %15 : vector<1x128xf32> to vector<128x128xf32>
    %17 = arith.addf %14, %16 : vector<128x128xf32>
    %18 = math.tanh %17 : vector<128x128xf32>
    %c0_10 = arith.constant 0 : index
    %c0_11 = arith.constant 0 : index
    %19 = vector.load %arg2[%c0_10, %c0_11] : memref<8x16xi32, #tpu.memory_space<vmem>>, vector<8x16xi32>
    %20 = arith.sitofp %19 : vector<8x16xi32> to vector<8x16xf32>
    %21 = vector.shape_cast %18 : vector<128x128xf32> to vector<8x16x128xf32>
    %22 = vector.shape_cast %20 : vector<8x16xf32> to vector<8x1x16xf32>
    "tpu.trace_start"() <{level = 10 : i32, message = "bql,blh->bqh"}> : () -> ()
    %cst_12 = arith.constant dense<0.000000e+00> : vector<8x1x128xf32>
    %23 = tpu.matmul %22, %21, %cst_12 {dimension_numbers = #tpu.dot_dimension_numbers<[2], [1], [1], [2], [0, 0, 0, 1, 1, 2], [0], [0]>} : vector<8x1x16xf32>, vector<8x16x128xf32>, vector<8x1x128xf32> -> vector<8x1x128xf32>
    "tpu.trace_stop"() : () -> ()
    %24 = vector.shape_cast %23 : vector<8x1x128xf32> to vector<8x128xf32>
    %cst_13 = arith.constant dense<0.000000e+00> : vector<8xf32>
    %25 = vector.multi_reduction <add>, %20, %cst_13 [1] : vector<8x16xf32> to vector<8xf32>
    %26 = vector.shape_cast %25 : vector<8xf32> to vector<8x1xf32>
    %cst_14 = arith.constant 9.99999971E-10 : f32
    %27 = vector.broadcast %cst_14 : f32 to vector<8x1xf32>
    %28 = arith.maximumf %26, %27 : vector<8x1xf32>
    %29 = vector.broadcast %28 : vector<8x1xf32> to vector<8x128xf32>
    %30 = arith.divf %24, %29 : vector<8x128xf32>
    %31 = arith.truncf %30 : vector<8x128xf32> to vector<8x128xbf16>
    %c0_15 = arith.constant 0 : index
    %c0_16 = arith.constant 0 : index
    %32 = vector.load %arg6[%c0_15, %c0_16] : memref<128x128xbf16, #tpu.memory_space<vmem>>, vector<128x128xbf16>
    %cst_17 = arith.constant dense<0.000000e+00> : vector<8x128xf32>
    %33 = tpu.matmul %31, %32, %cst_17 {dimension_numbers = #tpu.dot_dimension_numbers<[1], [0], [0], [1], [0, 0, 1, 1], [], []>} : vector<8x128xbf16>, vector<128x128xbf16>, vector<8x128xf32> -> vector<8x128xf32>
    %c0_18 = arith.constant 0 : index
    %c0_19 = arith.constant 0 : index
    %34 = vector.load %arg7[%c0_18, %c0_19] : memref<1x128xf32, #tpu.memory_space<vmem>>, vector<1x128xf32>
    %35 = vector.broadcast %34 : vector<1x128xf32> to vector<8x128xf32>
    %36 = arith.addf %33, %35 : vector<8x128xf32>
    %c0_20 = arith.constant 0 : index
    %c0_21 = arith.constant 0 : index
    %37 = vector.load %arg8[%c0_20, %c0_21] : memref<8x128xf32, #tpu.memory_space<vmem>>, vector<8x128xf32>
    tpu.vector_store %arg8[%c0_20, %c0_21], %36 {strides = array<i32>} : memref<8x128xf32, #tpu.memory_space<vmem>>, vector<8x128xf32>,
    return
  }
  func.func @transform_0(%arg0: i32) -> (i32, i32) {
    %c0_i32 = arith.constant 0 : i32
    %c0_i32_0 = arith.constant 0 : i32
    return %arg0, %c0_i32 : i32, i32
  }
  func.func @transform_1(%arg0: i32) -> (i32, i32) {
    %c0_i32 = arith.constant 0 : i32
    %c0_i32_0 = arith.constant 0 : i32
    return %arg0, %c0_i32 : i32, i32
  }
  func.func @transform_2(%arg0: i32) -> (i32, i32) {
    %c0_i32 = arith.constant 0 : i32
    %c0_i32_0 = arith.constant 0 : i32
    %c0_i32_1 = arith.constant 0 : i32
    return %c0_i32, %c0_i32_0 : i32, i32
  }
  func.func @transform_3(%arg0: i32) -> (i32, i32) {
    %c0_i32 = arith.constant 0 : i32
    %c0_i32_0 = arith.constant 0 : i32
    %c0_i32_1 = arith.constant 0 : i32
    return %c0_i32, %c0_i32_0 : i32, i32
  }
  func.func @transform_4(%arg0: i32) -> (i32, i32) {
    %c0_i32 = arith.constant 0 : i32
    %c0_i32_0 = arith.constant 0 : i32
    %c0_i32_1 = arith.constant 0 : i32
    return %c0_i32, %c0_i32_0 : i32, i32
  }
  func.func @transform_5(%arg0: i32) -> (i32, i32) {
    %c0_i32 = arith.constant 0 : i32
    %c0_i32_0 = arith.constant 0 : i32
    %c0_i32_1 = arith.constant 0 : i32
    return %c0_i32, %c0_i32_0 : i32, i32
  }
  func.func @transform_6(%arg0: i32) -> (i32, i32) {
    %c0_i32 = arith.constant 0 : i32
    %c0_i32_0 = arith.constant 0 : i32
    %c0_i32_1 = arith.constant 0 : i32
    return %c0_i32, %c0_i32_0 : i32, i32
  }
  func.func @transform_7(%arg0: i32) -> (i32, i32) {
    %c0_i32 = arith.constant 0 : i32
    %c0_i32_0 = arith.constant 0 : i32
    return %arg0, %c0_i32 : i32, i32
  }
}

</mosaic_0001>

<llo_original>
// kernel: tpu_custom_call.1
$region0: #{tpu_custom_call.1}
  #allocation0 [shape = 'u32[]', space=smem, size = 0x4, offset = 0x4, fixed_abs, tag = 'smem constant byte address 0x4 - core index']
  #allocation1 [shape = 'u32[144,128]{1,0:T(1,128)}', space=vmem, size = 0x12000, scoped, tag = 'internal scratch']
  %s0 = inlined_call_operand.hbm [shape: s32[16,16], index: 0, kind: input, shape index: {}]
  %s1 = inlined_call_operand.hbm [shape: s32[16,16], index: 1, kind: input, shape index: {}]
  %s2 = inlined_call_operand.hbm [shape: bf16[32,128], index: 2, kind: input, shape index: {}]
  %s3 = inlined_call_operand.hbm [shape: bf16[128,128], index: 3, kind: input, shape index: {}]
  %s4 = inlined_call_operand.vmem [shape: f32[1,128], index: 4, kind: input, shape index: {}]
  %s5 = inlined_call_operand.hbm [shape: bf16[128,128], index: 5, kind: input, shape index: {}]
  %s6 = inlined_call_operand.vmem [shape: f32[1,128], index: 6, kind: input, shape index: {}]
  %s7 = inlined_call_operand.hbm [shape: f32[16,128], index: 7, kind: output, shape index: {}]
  %s8 = sld [smem:[#allocation0]]
  $region81: #{tpu_custom_call.1} parent=0
    _
  %s10 = ssub.s32 1, %s8
  %s11 = scalar_select 0, %s10, %s8
  $region1: #{tpu_custom_call.1} parent=0
    #allocation2 [shape = 'u8[8192]{0}', space=vmem, size = 0x2000, scoped, tag = 'input window, operand 0']
    #allocation3 [shape = 's32[2]{0}', space=sflag, size = 0x8, scoped, tag = 'scoped memory for tpu_custom_call.1']
    #allocation4 [shape = 's32[2]{0}', space=sflag, size = 0x8, scoped, tag = 'scoped memory for tpu_custom_call.1']
    #allocation5 [shape = 'u8[8192]{0}', space=vmem, size = 0x2000, scoped, tag = 'input window, operand 1']
    #allocation6 [shape = 's32[2]{0}', space=sflag, size = 0x8, scoped, tag = 'scoped memory for tpu_custom_call.1']
    #allocation7 [shape = 'u8[8192]{0}', space=vmem, size = 0x2000, scoped, tag = 'input window, operand 2, single buffered']
    #allocation8 [shape = 'u8[32768]{0}', space=vmem, size = 0x8000, scoped, tag = 'input window, operand 3, single buffered']
    #allocation9 [shape = 's32[1]{0}', space=sflag, size = 0x4, scoped, tag = 'scoped memory for tpu_custom_call.1']
    #allocation10 [shape = 'u8[32768]{0}', space=vmem, size = 0x8000, scoped, tag = 'input window, operand 5, single buffered']
    #allocation11 [shape = 'u8[8192]{0}', space=vmem, size = 0x2000, scoped, tag = 'output window, operand 0']
    %12 = vsyncpa [#allocation3], 0
    %s13 = scalar_lea.sflag [#allocation3], 1
    %14 = vsyncpa %s13, 0
    %15 = vsyncpa [#allocation6], 0
    %s16 = scalar_lea.sflag [#allocation6], 1
    %17 = vsyncpa %s16, 0
    %18 = vsyncpa [#allocation9], 0
    %19 = vsyncpa [#allocation4], 0
    %s20 = scalar_lea.sflag [#allocation4], 1
    %21 = vsyncpa %s20, 0
    loop: start=0, step=1, limit=4
    $region2: #{tpu_custom_call.1} parent=1 // loop_pre_header
      _
    $region3: #{tpu_custom_call.1} parent=1 // loop_header
      %s23 = sphi 0, %s27
      %p24 = scmp.ge.s32.totalorder %s23, 4
      %s33 = sphi 0, %s35
      %s36 = sphi 0, %s33
      %s37 = sphi 0, %s36
      %s53 = sphi 0, %s37
      %s59 = sphi 0, %s61
      %s62 = sphi 0, %s59
      %s63 = sphi 0, %s62
      %s79 = sphi 0, %s63
      %s83 = sphi 0, %s83
      %s85 = sphi 0, %s83
      %s86 = sphi 0, %s85
      %s100 = sphi 0, %s86
      %s104 = sphi 0, %s104
      %s106 = sphi 0, %s104
      %s107 = sphi 0, %s106
      %s121 = sphi 0, %s107
      %s125 = sphi 0, %s125
      %s127 = sphi 0, %s125
      %s128 = sphi 0, %s127
      %s142 = sphi 0, %s128
      %s146 = sphi 0, %s146
      %s148 = sphi 0, %s146
      %s149 = sphi 0, %s148
      %s163 = sphi 0, %s149
      %s167 = sphi 0, %s167
      %s169 = sphi 0, %s167
      %s170 = sphi 0, %s169
      %s184 = sphi 0, %s170
      %s190 = sphi 0, %s192
      %s193 = sphi 0, %s190
      %s194 = sphi 0, %s193
      %s210 = sphi 0, %s194
    $region4: #{tpu_custom_call.1} parent=1 // loop_header_branch
      %26 = sbr.rel (%p24) target = $region8
    $region5: #{tpu_custom_call.1} parent=1 // loop_body
      %s28 = ssub.s32 %s23, 1
      %s29 = ssub.s32 %s23, 2
      %s30 = sadd.s32 %s23, 1
      %s31 = ssub.s32 %s23, %s30
      %p32 = scmp.eq.s32.totalorder %s31, 0
      %s34 = sadd.s32 %s33, 1
      %s35 = scalar_select %p32, %s33, %s34
      %p38 = pneg %p32
      %p39 = scmp.eq.s32.totalorder %s23, 1
      %p40 = por %p38, %p39
      %p41 = scmp.ne.s32.totalorder %s33, %s36
      %p42 = scmp.eq.s32.totalorder %s23, 0
      %p43 = por %p41, %p42
      %p44 = scmp.ne.s32.totalorder %s33, %s36
      %p45 = scmp.eq.s32.totalorder %s28, 1
      %p46 = por %p44, %p45
      %p47 = scmp.ne.s32.totalorder %s36, %s37
      %p48 = scmp.eq.s32.totalorder %s28, 0
      %p49 = por %p47, %p48
      %p50 = scmp.ne.s32.totalorder %s36, %s37
      %p51 = scmp.eq.s32.totalorder %s29, 1
      %p52 = por %p50, %p51
      %p54 = scmp.ne.s32.totalorder %s37, %s53
      %p55 = scmp.eq.s32.totalorder %s29, 0
      %p56 = por %p54, %p55
      %s57 = ssub.s32 %s23, %s30
      %p58 = scmp.eq.s32.totalorder %s57, 0
      %s60 = sadd.s32 %s59, 1
      %s61 = scalar_select %p58, %s59, %s60
      %p64 = pneg %p58
      %p65 = scmp.eq.s32.totalorder %s23, 1
      %p66 = por %p64, %p65
      %p67 = scmp.ne.s32.totalorder %s59, %s62
      %p68 = scmp.eq.s32.totalorder %s23, 0
      %p69 = por %p67, %p68
      %p70 = scmp.ne.s32.totalorder %s59, %s62
      %p71 = scmp.eq.s32.totalorder %s28, 1
      %p72 = por %p70, %p71
      %p73 = scmp.ne.s32.totalorder %s62, %s63
      %p74 = scmp.eq.s32.totalorder %s28, 0
      %p75 = por %p73, %p74
      %p76 = scmp.ne.s32.totalorder %s62, %s63
      %p77 = scmp.eq.s32.totalorder %s29, 1
      %p78 = por %p76, %p77
      %p80 = scmp.ne.s32.totalorder %s63, %s79
      %p81 = scmp.eq.s32.totalorder %s29, 0
      %p82 = por %p80, %p81
      %s84 = sadd.s32 %s83, 1
      %p87 = scmp.eq.s32.totalorder %s23, 1
      %p88 = scmp.ne.s32.totalorder %s83, %s85
      %p89 = scmp.eq.s32.totalorder %s23, 0
      %p90 = por %p88, %p89
      %p91 = scmp.ne.s32.totalorder %s83, %s85
      %p92 = scmp.eq.s32.totalorder %s28, 1
      %p93 = por %p91, %p92
      %p94 = scmp.ne.s32.totalorder %s85, %s86
      %p95 = scmp.eq.s32.totalorder %s28, 0
      %p96 = por %p94, %p95
      %p97 = scmp.ne.s32.totalorder %s85, %s86
      %p98 = scmp.eq.s32.totalorder %s29, 1
      %p99 = por %p97, %p98
      %p101 = scmp.ne.s32.totalorder %s86, %s100
      %p102 = scmp.eq.s32.totalorder %s29, 0
      %p103 = por %p101, %p102
      %s105 = sadd.s32 %s104, 1
      %p108 = scmp.eq.s32.totalorder %s23, 1
      %p109 = scmp.ne.s32.totalorder %s104, %s106
      %p110 = scmp.eq.s32.totalorder %s23, 0
      %p111 = por %p109, %p110
      %p112 = scmp.ne.s32.totalorder %s104, %s106
      %p113 = scmp.eq.s32.totalorder %s28, 1
      %p114 = por %p112, %p113
      %p115 = scmp.ne.s32.totalorder %s106, %s107
      %p116 = scmp.eq.s32.totalorder %s28, 0
      %p117 = por %p115, %p116
      %p118 = scmp.ne.s32.totalorder %s106, %s107
      %p119 = scmp.eq.s32.totalorder %s29, 1
      %p120 = por %p118, %p119
      %p122 = scmp.ne.s32.totalorder %s107, %s121
      %p123 = scmp.eq.s32.totalorder %s29, 0
      %p124 = por %p122, %p123
      %s126 = sadd.s32 %s125, 1
      %p129 = scmp.eq.s32.totalorder %s23, 1
      %p130 = scmp.ne.s32.totalorder %s125, %s127
      %p131 = scmp.eq.s32.totalorder %s23, 0
      %p132 = por %p130, %p131
      %p133 = scmp.ne.s32.totalorder %s125, %s127
      %p134 = scmp.eq.s32.totalorder %s28, 1
      %p135 = por %p133, %p134
      %p136 = scmp.ne.s32.totalorder %s127, %s128
      %p137 = scmp.eq.s32.totalorder %s28, 0
      %p138 = por %p136, %p137
      %p139 = scmp.ne.s32.totalorder %s127, %s128
      %p140 = scmp.eq.s32.totalorder %s29, 1
      %p141 = por %p139, %p140
      %p143 = scmp.ne.s32.totalorder %s128, %s142
      %p144 = scmp.eq.s32.totalorder %s29, 0
      %p145 = por %p143, %p144
      %s147 = sadd.s32 %s146, 1
      %p150 = scmp.eq.s32.totalorder %s23, 1
      %p151 = scmp.ne.s32.totalorder %s146, %s148
      %p152 = scmp.eq.s32.totalorder %s23, 0
      %p153 = por %p151, %p152
      %p154 = scmp.ne.s32.totalorder %s146, %s148
      %p155 = scmp.eq.s32.totalorder %s28, 1
      %p156 = por %p154, %p155
      %p157 = scmp.ne.s32.totalorder %s148, %s149
      %p158 = scmp.eq.s32.totalorder %s28, 0
      %p159 = por %p157, %p158
      %p160 = scmp.ne.s32.totalorder %s148, %s149
      %p161 = scmp.eq.s32.totalorder %s29, 1
      %p162 = por %p160, %p161
      %p164 = scmp.ne.s32.totalorder %s149, %s163
      %p165 = scmp.eq.s32.totalorder %s29, 0
      %p166 = por %p164, %p165
      %s168 = sadd.s32 %s167, 1
      %p171 = scmp.eq.s32.totalorder %s23, 1
      %p172 = scmp.ne.s32.totalorder %s167, %s169
      %p173 = scmp.eq.s32.totalorder %s23, 0
      %p174 = por %p172, %p173
      %p175 = scmp.ne.s32.totalorder %s167, %s169
      %p176 = scmp.eq.s32.totalorder %s28, 1
      %p177 = por %p175, %p176
      %p178 = scmp.ne.s32.totalorder %s169, %s170
      %p179 = scmp.eq.s32.totalorder %s28, 0
      %p180 = por %p178, %p179
      %p181 = scmp.ne.s32.totalorder %s169, %s170
      %p182 = scmp.eq.s32.totalorder %s29, 1
      %p183 = por %p181, %p182
      %p185 = scmp.ne.s32.totalorder %s170, %s184
      %p186 = scmp.eq.s32.totalorder %s29, 0
      %p187 = por %p185, %p186
      %s188 = ssub.s32 %s23, %s30
      %p189 = scmp.eq.s32.totalorder %s188, 0
      %s191 = sadd.s32 %s190, 1
      %s192 = scalar_select %p189, %s190, %s191
      %p195 = pneg %p189
      %p196 = scmp.eq.s32.totalorder %s23, 1
      %p197 = por %p195, %p196
      %p198 = scmp.ne.s32.totalorder %s190, %s193
      %p199 = scmp.eq.s32.totalorder %s23, 0
      %p200 = por %p198, %p199
      %p201 = scmp.ne.s32.totalorder %s190, %s193
      %p202 = scmp.eq.s32.totalorder %s28, 1
      %p203 = por %p201, %p202
      %p204 = scmp.ne.s32.totalorder %s193, %s194
      %p205 = scmp.eq.s32.totalorder %s28, 0
      %p206 = por %p204, %p205
      %p207 = scmp.ne.s32.totalorder %s193, %s194
      %p208 = scmp.eq.s32.totalorder %s29, 1
      %p209 = por %p207, %p208
      %p211 = scmp.ne.s32.totalorder %s194, %s210
      %p212 = scmp.eq.s32.totalorder %s29, 0
      %p213 = por %p211, %p212
      %p214 = scmp.le.s32.totalorder 1, %s23
      %p215 = scmp.lt.s32.totalorder %s23, 3
      %p216 = pnand %p214, %p215
      %p217 = pneg %p216
      // Predicated region
      $region9: #{tpu_custom_call.1} parent=5 // pred_check
        _
      $region10: #{tpu_custom_call.1} parent=5 // pred_check_branch
        %219 = sbr.rel (%p216) target = $region12
      $region11: #{tpu_custom_call.1} parent=5 // pred_region
        %s220 = ssub.s32 %s23, 1
        // Predicated region
        $region13: #{tpu_custom_call.1} parent=11 // pred_check
          %p221 = pneg %p96
        $region14: #{tpu_custom_call.1} parent=11 // pred_check_branch
          %223 = sbr.rel (%p221) target = $region16
        $region15: #{tpu_custom_call.1} parent=11 // pred_region
          %s225 = ssub.s32 256, 256
          %226 = vsyncadd [#allocation6], %s225
          %s227 = sshll.u32 [#allocation7], 4
          %s228 = int_to_ptr.vmem [resolvable:$true] %s227
          %233 = dma.hbm_to_vmem [thread:$0]  %s2, 256, %s228, [#allocation6], 64, 64, 4
        $region16: #{tpu_custom_call.1} parent=11 // pred_fallthru
          _
        // Predicated region
        $region17: #{tpu_custom_call.1} parent=11 // pred_check
          %p234 = pneg %p117
        $region18: #{tpu_custom_call.1} parent=11 // pred_check_branch
          %236 = sbr.rel (%p234) target = $region20
        $region19: #{tpu_custom_call.1} parent=11 // pred_region
          %s238 = ssub.s32 1024, 1024
          %239 = vsyncadd [#allocation9], %s238
          %s240 = sshll.u32 [#allocation8], 4
          %s241 = int_to_ptr.vmem [resolvable:$true] %s240
          %246 = dma.hbm_to_vmem [thread:$0]  %s3, 1024, %s241, [#allocation9], 64, 64, 4
        $region20: #{tpu_custom_call.1} parent=11 // pred_fallthru
          _
        // Predicated region
        $region21: #{tpu_custom_call.1} parent=11 // pred_check
          %p247 = pneg %p138
        $region22: #{tpu_custom_call.1} parent=11 // pred_check_branch
          %249 = sbr.rel (%p247) target = $region24
        $region23: #{tpu_custom_call.1} parent=11 // pred_region
          _
        $region24: #{tpu_custom_call.1} parent=11 // pred_fallthru
          _
        // Predicated region
        $region25: #{tpu_custom_call.1} parent=11 // pred_check
          %p250 = pneg %p159
        $region26: #{tpu_custom_call.1} parent=11 // pred_check_branch
          %252 = sbr.rel (%p250) target = $region28
        $region27: #{tpu_custom_call.1} parent=11 // pred_region
          %s254 = ssub.s32 1024, 1024
          %255 = vsyncadd [#allocation9], %s254
          %s256 = sshll.u32 [#allocation10], 4
          %s257 = int_to_ptr.vmem [resolvable:$true] %s256
          %262 = dma.hbm_to_vmem [thread:$0]  %s5, 1024, %s257, [#allocation9], 64, 64, 4
        $region28: #{tpu_custom_call.1} parent=11 // pred_fallthru
          _
        // Predicated region
        $region29: #{tpu_custom_call.1} parent=11 // pred_check
          %p263 = pneg %p180
        $region30: #{tpu_custom_call.1} parent=11 // pred_check_branch
          %265 = sbr.rel (%p263) target = $region32
        $region31: #{tpu_custom_call.1} parent=11 // pred_region
          _
        $region32: #{tpu_custom_call.1} parent=11 // pred_fallthru
          _
      $region12: #{tpu_custom_call.1} parent=5 // pred_fallthru
        _
      %p266 = scmp.lt.s32.totalorder %s23, 2
      // Predicated region
      $region33: #{tpu_custom_call.1} parent=5 // pred_check
        %p267 = pneg %p266
      $region34: #{tpu_custom_call.1} parent=5 // pred_check_branch
        %269 = sbr.rel (%p267) target = $region36
      $region35: #{tpu_custom_call.1} parent=5 // pred_region
        // Predicated region
        $region37: #{tpu_custom_call.1} parent=35 // pred_check
          %p270 = pneg %p43
        $region38: #{tpu_custom_call.1} parent=35 // pred_check_branch
          %272 = sbr.rel (%p270) target = $region40
        $region39: #{tpu_custom_call.1} parent=35 // pred_region
          %s273 = sand.u32 %s33, 1
          %s274 = scalar_lea.sflag [#allocation3], %s273
          %s275 = sand.u32 %s33, 1
          %s276 = smul.addr %s275, 8
          %s277 = scalar_lea.vmem [#allocation2], %s276
          %s279 = ssub.s32 128, 128
          %280 = vsyncadd %s274, %s279
          %s281 = smul.addr %s23, 128
          %s282 = scalar_lea.hbm %s0, %s281
          %s284 = sshll.u32 %s277, 4
          %s285 = int_to_ptr.vmem [resolvable:$true] %s284
          %287 = dma.hbm_to_vmem [thread:$0]  %s282, 128, %s285, %s274
        $region40: #{tpu_custom_call.1} parent=35 // pred_fallthru
          _
        // Predicated region
        $region41: #{tpu_custom_call.1} parent=35 // pred_check
          %p288 = pneg %p69
        $region42: #{tpu_custom_call.1} parent=35 // pred_check_branch
          %290 = sbr.rel (%p288) target = $region44
        $region43: #{tpu_custom_call.1} parent=35 // pred_region
          %s291 = sand.u32 %s23, 1
          %s292 = scalar_lea.sflag [#allocation6], %s291
          %s293 = sand.u32 %s59, 1
          %s294 = smul.addr %s293, 8
          %s295 = scalar_lea.vmem [#allocation5], %s294
          %s297 = ssub.s32 128, 128
          %298 = vsyncadd %s292, %s297
          %s299 = smul.addr %s23, 128
          %s300 = scalar_lea.hbm %s1, %s299
          %s302 = sshll.u32 %s295, 4
          %s303 = int_to_ptr.vmem [resolvable:$true] %s302
          %305 = dma.hbm_to_vmem [thread:$0]  %s300, 128, %s303, %s292
        $region44: #{tpu_custom_call.1} parent=35 // pred_fallthru
          _
      $region36: #{tpu_custom_call.1} parent=5 // pred_fallthru
        _
      %p306 = scmp.le.s32.totalorder 1, %s23
      %p307 = scmp.lt.s32.totalorder %s23, 3
      %p308 = pnand %p306, %p307
      %p309 = pneg %p308
      // Predicated region
      $region45: #{tpu_custom_call.1} parent=5 // pred_check
        _
      $region46: #{tpu_custom_call.1} parent=5 // pred_check_branch
        %311 = sbr.rel (%p308) target = $region48
      $region47: #{tpu_custom_call.1} parent=5 // pred_region
        %s312 = ssub.s32 %s23, 1
        %s313 = sand.u32 %s36, 1
        %s314 = scalar_lea.sflag [#allocation3], %s313
        %s315 = sand.u32 %s36, 1
        %s316 = smul.addr %s315, 8
        %s317 = scalar_lea.vmem [#allocation2], %s316
        // Predicated region
        $region49: #{tpu_custom_call.1} parent=47 // pred_check
          %p318 = pneg %p49
        $region50: #{tpu_custom_call.1} parent=47 // pred_check_branch
          %320 = sbr.rel (%p318) target = $region52
        $region51: #{tpu_custom_call.1} parent=47 // pred_region
          %321 = dma.done %s314, 128
        $region52: #{tpu_custom_call.1} parent=47 // pred_fallthru
          _
        %s322 = sand.u32 %s28, 1
        %s323 = scalar_lea.sflag [#allocation6], %s322
        %s324 = sand.u32 %s62, 1
        %s325 = smul.addr %s324, 8
        %s326 = scalar_lea.vmem [#allocation5], %s325
        // Predicated region
        $region53: #{tpu_custom_call.1} parent=47 // pred_check
          %p327 = pneg %p75
        $region54: #{tpu_custom_call.1} parent=47 // pred_check_branch
          %329 = sbr.rel (%p327) target = $region56
        $region55: #{tpu_custom_call.1} parent=47 // pred_region
          %330 = dma.done %s323, 128
        $region56: #{tpu_custom_call.1} parent=47 // pred_fallthru
          _
        // Predicated region
        $region57: #{tpu_custom_call.1} parent=47 // pred_check
          %p331 = pneg %p96
        $region58: #{tpu_custom_call.1} parent=47 // pred_check_branch
          %333 = sbr.rel (%p331) target = $region60
        $region59: #{tpu_custom_call.1} parent=47 // pred_region
          %334 = dma.done [#allocation6], 256
        $region60: #{tpu_custom_call.1} parent=47 // pred_fallthru
          _
        // Predicated region
        $region61: #{tpu_custom_call.1} parent=47 // pred_check
          %p335 = pneg %p117
        $region62: #{tpu_custom_call.1} parent=47 // pred_check_branch
          %337 = sbr.rel (%p335) target = $region64
        $region63: #{tpu_custom_call.1} parent=47 // pred_region
          %338 = dma.done [#allocation9], 1024
        $region64: #{tpu_custom_call.1} parent=47 // pred_fallthru
          _
        // Predicated region
        $region65: #{tpu_custom_call.1} parent=47 // pred_check
          %p339 = pneg %p159
        $region66: #{tpu_custom_call.1} parent=47 // pred_check_branch
          %341 = sbr.rel (%p339) target = $region68
        $region67: #{tpu_custom_call.1} parent=47 // pred_region
          %342 = dma.done [#allocation9], 1024
        $region68: #{tpu_custom_call.1} parent=47 // pred_fallthru
          _
        %s343 = sand.u32 %s36, 1
        %s344 = scalar_lea.sflag [#allocation3], %s343
        %s345 = sand.u32 %s36, 1
        %s346 = smul.addr %s345, 8
        %s347 = scalar_lea.vmem [#allocation2], %s346
        %p348 = pneg %p49
        %p349 = pneg %p46
        %s350 = sand.u32 %s28, 1
        %s351 = scalar_lea.sflag [#allocation6], %s350
        %s352 = sand.u32 %s62, 1
        %s353 = smul.addr %s352, 8
        %s354 = scalar_lea.vmem [#allocation5], %s353
        %p355 = pneg %p75
        %p356 = pneg %p72
        %p357 = pneg %p96
        %p358 = pneg %p93
        %p359 = pneg %p117
        %p360 = pneg %p114
        %p361 = pneg %p138
        %p362 = pneg %p135
        %p363 = pneg %p159
        %p364 = pneg %p156
        %p365 = pneg %p180
        %p366 = pneg %p177
        %p367 = pneg %p206
        %p368 = pneg %p203
        %s369 = sand.u32 %s193, 1
        %s370 = scalar_lea.sflag [#allocation4], %s369
        %s371 = sand.u32 %s193, 1
        %s372 = smul.addr %s371, 8
        %s373 = scalar_lea.vmem [#allocation11], %s372
        %v375 = vld [vmem:[%s317] sm:$0xff]
        %v376 = vlaneseq
        %v377 = vshrl.u32 %v376, 7
        %v378 = vsub.s32 0, %v377
        %v379 = vrot.slane %v375, %v378
        %381 = vbcast.lane.b32.xlu0 %v379, 256
        %v382 = vpop.permute.xlu0 %381
        %s384 = sor.u32 256, 8
        %385 = vbcast.lane.b32.xlu0 %v379, %s384
        %v386 = vpop.permute.xlu0 %385
        %v387 = vlaneseq
        %v388 = vshrl.u32 %v387, 7
        %v389 = vsub.s32 1, %v388
        %v390 = vrot.slane %v375, %v389
        %392 = vbcast.lane.b32.xlu0 %v390, 256
        %v393 = vpop.permute.xlu0 %392
        %s395 = sor.u32 256, 8
        %396 = vbcast.lane.b32.xlu0 %v390, %s395
        %v397 = vpop.permute.xlu0 %396
        %v398 = vlaneseq
        %v399 = vshrl.u32 %v398, 7
        %v400 = vsub.s32 2, %v399
        %v401 = vrot.slane %v375, %v400
        %403 = vbcast.lane.b32.xlu0 %v401, 256
        %v404 = vpop.permute.xlu0 %403
        %s406 = sor.u32 256, 8
        %407 = vbcast.lane.b32.xlu0 %v401, %s406
        %v408 = vpop.permute.xlu0 %407
        %v409 = vlaneseq
        %v410 = vshrl.u32 %v409, 7
        %v411 = vsub.s32 3, %v410
        %v412 = vrot.slane %v375, %v411
        %414 = vbcast.lane.b32.xlu0 %v412, 256
        %v415 = vpop.permute.xlu0 %414
        %s417 = sor.u32 256, 8
        %418 = vbcast.lane.b32.xlu0 %v412, %s417
        %v419 = vpop.permute.xlu0 %418
        %v420 = vlaneseq
        %v421 = vshrl.u32 %v420, 7
        %v422 = vsub.s32 4, %v421
        %v423 = vrot.slane %v375, %v422
        %425 = vbcast.lane.b32.xlu0 %v423, 256
        %v426 = vpop.permute.xlu0 %425
        %s428 = sor.u32 256, 8
        %429 = vbcast.lane.b32.xlu0 %v423, %s428
        %v430 = vpop.permute.xlu0 %429
        %v431 = vlaneseq
        %v432 = vshrl.u32 %v431, 7
        %v433 = vsub.s32 5, %v432
        %v434 = vrot.slane %v375, %v433
        %436 = vbcast.lane.b32.xlu0 %v434, 256
        %v437 = vpop.permute.xlu0 %436
        %s439 = sor.u32 256, 8
        %440 = vbcast.lane.b32.xlu0 %v434, %s439
        %v441 = vpop.permute.xlu0 %440
        %v442 = vlaneseq
        %v443 = vshrl.u32 %v442, 7
        %v444 = vsub.s32 6, %v443
        %v445 = vrot.slane %v375, %v444
        %447 = vbcast.lane.b32.xlu0 %v445, 256
        %v448 = vpop.permute.xlu0 %447
        %s450 = sor.u32 256, 8
        %451 = vbcast.lane.b32.xlu0 %v445, %s450
        %v452 = vpop.permute.xlu0 %451
        %v453 = vlaneseq
        %v454 = vshrl.u32 %v453, 7
        %v455 = vsub.s32 7, %v454
        %v456 = vrot.slane %v375, %v455
        %458 = vbcast.lane.b32.xlu0 %v456, 256
        %v459 = vpop.permute.xlu0 %458
        %s461 = sor.u32 256, 8
        %462 = vbcast.lane.b32.xlu0 %v456, %s461
        %v463 = vpop.permute.xlu0 %462
        %v464 = vlaneseq
        %v465 = vand.u32 %v464, 127
        %vm466 = vcmp.eq.s32.totalorder %v382, %v465
        %vm467 = vcmp.eq.s32.totalorder %v386, %v465
        %vm468 = vcmp.eq.s32.totalorder %v393, %v465
        %vm469 = vcmp.eq.s32.totalorder %v397, %v465
        %vm470 = vcmp.eq.s32.totalorder %v404, %v465
        %vm471 = vcmp.eq.s32.totalorder %v408, %v465
        %vm472 = vcmp.eq.s32.totalorder %v415, %v465
        %vm473 = vcmp.eq.s32.totalorder %v419, %v465
        %vm474 = vcmp.eq.s32.totalorder %v426, %v465
        %vm475 = vcmp.eq.s32.totalorder %v430, %v465
        %vm476 = vcmp.eq.s32.totalorder %v437, %v465
        %vm477 = vcmp.eq.s32.totalorder %v441, %v465
        %vm478 = vcmp.eq.s32.totalorder %v448, %v465
        %vm479 = vcmp.eq.s32.totalorder %v452, %v465
        %vm480 = vcmp.eq.s32.totalorder %v459, %v465
        %vm481 = vcmp.eq.s32.totalorder %v463, %v465
        %v482 = vsel %vm466, 1.0, 0.0
        %v483 = vsel %vm467, 1.0, 0.0
        %v484 = vsel %vm468, 1.0, 0.0
        %v485 = vsel %vm469, 1.0, 0.0
        %v486 = vsel %vm470, 1.0, 0.0
        %v487 = vsel %vm471, 1.0, 0.0
        %v488 = vsel %vm472, 1.0, 0.0
        %v489 = vsel %vm473, 1.0, 0.0
        %v490 = vsel %vm474, 1.0, 0.0
        %v491 = vsel %vm475, 1.0, 0.0
        %v492 = vsel %vm476, 1.0, 0.0
        %v493 = vsel %vm477, 1.0, 0.0
        %v494 = vsel %vm478, 1.0, 0.0
        %v495 = vsel %vm479, 1.0, 0.0
        %v496 = vsel %vm480, 1.0, 0.0
        %v497 = vsel %vm481, 1.0, 0.0
        %v498 = vpack.c.bf16 %v483, %v482
        %v499 = vpack.c.bf16 %v485, %v484
        %v500 = vpack.c.bf16 %v487, %v486
        %v501 = vpack.c.bf16 %v489, %v488
        %v502 = vpack.c.bf16 %v491, %v490
        %v503 = vpack.c.bf16 %v493, %v492
        %v504 = vpack.c.bf16 %v495, %v494
        %v505 = vpack.c.bf16 %v497, %v496
        %v506 = vld [vmem:[#allocation7] sm:$0xf]
        %v507 = vld [vmem:[#allocation7 + $0x4] sm:$0xf]
        %v508 = vld [vmem:[#allocation7 + $0x8] sm:$0xf]
        %v509 = vld [vmem:[#allocation7 + $0xc] sm:$0xf]
        %v514 = vunpack.c.l.b16 %v506
        %v515 = vunpack.c.l.b16 %v507
        %v516 = vunpack.c.l.b16 %v508
        %v517 = vunpack.c.l.b16 %v509
        %v518 = vpack.c.b16 %v515, %v514
        %v519 = vpack.c.b16 %v517, %v516
        %vm522 = vcmask 261120
        %v524 = vsel %vm522, %v498, 0
        %v527 = vsel %vm522, %v499, 0
        %v530 = vsel %vm522, %v500, 0
        %v533 = vsel %vm522, %v501, 0
        %v536 = vsel %vm522, %v502, 0
        %v539 = vsel %vm522, %v503, 0
        %v542 = vsel %vm522, %v504, 0
        %v545 = vsel %vm522, %v505, 0
        %547 = vmatprep.subr.bf16.mxu0 0
        %548 = vmatpush1.bf16.msra.mxu0 0
        %549 = vmatprep.subr.bf16.mxu0 0
        %550 = vmatpush1.bf16.msra.mxu0 0
        %551 = vmatprep.subr.bf16.mxu0 0
        %552 = vmatpush1.bf16.msra.mxu0 0
        %553 = vmatprep.subr.bf16.mxu0 0
        %554 = vmatpush1.bf16.msra.mxu0 0
        %555 = vmatprep.subr.bf16.mxu0 0
        %556 = vmatpush1.bf16.msra.mxu0 0
        %557 = vmatprep.subr.bf16.mxu0 0
        %558 = vmatpush1.bf16.msra.mxu0 0
        %559 = vmatprep.subr.bf16.mxu0 0
        %560 = vmatpush1.bf16.msra.mxu0 %v519
        %561 = vmatprep.subr.bf16.mxu0 0
        %562 = vmatpush1.bf16.msra.mxu0 %v518
        %563 = vmatprep.subr.bf16.mxu0 0
        %564 = vmatpush2.bf16.msra.mxu0 0
        %565 = vmatprep.subr.bf16.mxu0 0
        %566 = vmatpush2.bf16.msra.mxu0 0
        %567 = vmatprep.subr.bf16.mxu0 0
        %568 = vmatpush2.bf16.msra.mxu0 0
        %569 = vmatprep.subr.bf16.mxu0 0
        %570 = vmatpush2.bf16.msra.mxu0 0
        %571 = vmatprep.subr.bf16.mxu0 0
        %572 = vmatpush2.bf16.msra.mxu0 0
        %573 = vmatprep.subr.bf16.mxu0 0
        %574 = vmatpush2.bf16.msra.mxu0 0
        %575 = vmatprep.subr.bf16.mxu0 0
        %576 = vmatpush2.bf16.msra.mxu0 0
        %577 = vmatprep.subr.bf16.mxu0 0
        %578 = vmatpush2.bf16.msra.mxu0 0
        %579 = vmatprep.mubr.bf16.mxu0 0
        %580 = vmatmul.mubr.bf16.gmra.mxu0 %v524
        %v581 = vpop.f32.mrf.mxu0
        %v582 = vadd.f32 0.0, %v581
        %v583 = vpop.f32.mrf.mxu0
        %v584 = vpop.f32.mrf.mxu0
        %v585 = vadd.f32 0.0, %v584
        %v586 = vpop.f32.mrf.mxu0
        %587 = vmatprep.mubr.bf16.mxu0 0
        %588 = vmatmul.mubr.bf16.gmra.mxu0 %v527
        %v589 = vpop.f32.mrf.mxu0
        %v590 = vadd.f32 0.0, %v589
        %v591 = vpop.f32.mrf.mxu0
        %v592 = vpop.f32.mrf.mxu0
        %v593 = vadd.f32 0.0, %v592
        %v594 = vpop.f32.mrf.mxu0
        %595 = vmatprep.mubr.bf16.mxu0 0
        %596 = vmatmul.mubr.bf16.gmra.mxu0 %v530
        %v597 = vpop.f32.mrf.mxu0
        %v598 = vadd.f32 0.0, %v597
        %v599 = vpop.f32.mrf.mxu0
        %v600 = vpop.f32.mrf.mxu0
        %v601 = vadd.f32 0.0, %v600
        %v602 = vpop.f32.mrf.mxu0
        %603 = vmatprep.mubr.bf16.mxu0 0
        %604 = vmatmul.mubr.bf16.gmra.mxu0 %v533
        %v605 = vpop.f32.mrf.mxu0
        %v606 = vadd.f32 0.0, %v605
        %v607 = vpop.f32.mrf.mxu0
        %v608 = vpop.f32.mrf.mxu0
        %v609 = vadd.f32 0.0, %v608
        %v610 = vpop.f32.mrf.mxu0
        %611 = vmatprep.mubr.bf16.mxu0 0
        %612 = vmatmul.mubr.bf16.gmra.mxu0 %v536
        %v613 = vpop.f32.mrf.mxu0
        %v614 = vadd.f32 0.0, %v613
        %v615 = vpop.f32.mrf.mxu0
        %v616 = vpop.f32.mrf.mxu0
        %v617 = vadd.f32 0.0, %v616
        %v618 = vpop.f32.mrf.mxu0
        %619 = vmatprep.mubr.bf16.mxu0 0
        %620 = vmatmul.mubr.bf16.gmra.mxu0 %v539
        %v621 = vpop.f32.mrf.mxu0
        %v622 = vadd.f32 0.0, %v621
        %v623 = vpop.f32.mrf.mxu0
        %v624 = vpop.f32.mrf.mxu0
        %v625 = vadd.f32 0.0, %v624
        %v626 = vpop.f32.mrf.mxu0
        %627 = vmatprep.mubr.bf16.mxu0 0
        %628 = vmatmul.mubr.bf16.gmra.mxu0 %v542
        %v629 = vpop.f32.mrf.mxu0
        %v630 = vadd.f32 0.0, %v629
        %v631 = vpop.f32.mrf.mxu0
        %v632 = vpop.f32.mrf.mxu0
        %v633 = vadd.f32 0.0, %v632
        %v634 = vpop.f32.mrf.mxu0
        %635 = vmatprep.mubr.bf16.mxu0 0
        %636 = vmatmul.mubr.bf16.gmra.mxu0 %v545
        %v637 = vpop.f32.mrf.mxu0
        %v638 = vadd.f32 0.0, %v637
        %v639 = vpop.f32.mrf.mxu0
        %v640 = vpop.f32.mrf.mxu0
        %v641 = vadd.f32 0.0, %v640
        %v642 = vpop.f32.mrf.mxu0
        %643 = vdwg.mxu0
        %v644 = vpack.c.bf16 %v585, %v582
        %v645 = vpack.c.bf16 %v593, %v590
        %v646 = vpack.c.bf16 %v601, %v598
        %v647 = vpack.c.bf16 %v609, %v606
        %v648 = vpack.c.bf16 %v617, %v614
        %v649 = vpack.c.bf16 %v625, %v622
        %v650 = vpack.c.bf16 %v633, %v630
        %v651 = vpack.c.bf16 %v641, %v638
        %v652 = vld [vmem:[#allocation8] sm:$0xf]
        %v653 = vld [vmem:[#allocation8 + $0x4] sm:$0xf]
        %v654 = vld [vmem:[#allocation8 + $0x8] sm:$0xf]
        %v655 = vld [vmem:[#allocation8 + $0xc] sm:$0xf]
        %v656 = vld [vmem:[#allocation8 + $0x10] sm:$0xf]
        %v657 = vld [vmem:[#allocation8 + $0x14] sm:$0xf]
        %v658 = vld [vmem:[#allocation8 + $0x18] sm:$0xf]
        %v659 = vld [vmem:[#allocation8 + $0x1c] sm:$0xf]
        %v660 = vld [vmem:[#allocation8 + $0x20] sm:$0xf]
        %v661 = vld [vmem:[#allocation8 + $0x24] sm:$0xf]
        %v662 = vld [vmem:[#allocation8 + $0x28] sm:$0xf]
        %v663 = vld [vmem:[#allocation8 + $0x2c] sm:$0xf]
        %v664 = vld [vmem:[#allocation8 + $0x30] sm:$0xf]
        %v665 = vld [vmem:[#allocation8 + $0x34] sm:$0xf]
        %v666 = vld [vmem:[#allocation8 + $0x38] sm:$0xf]
        %v667 = vld [vmem:[#allocation8 + $0x3c] sm:$0xf]
        %v668 = vld [vmem:[%s4] sm:$0x1]
        %v670 = vlaneseq
        %v671 = vshrl.u32 %v670, 7
        %v672 = vsub.s32 0, %v671
        %v673 = vrot.slane %v668, %v672
        %v691 = vunpack.c.l.b16 %v652
        %v692 = vunpack.c.l.b16 %v653
        %v693 = vunpack.c.l.b16 %v654
        %v694 = vunpack.c.l.b16 %v655
        %v695 = vunpack.c.l.b16 %v656
        %v696 = vunpack.c.l.b16 %v657
        %v697 = vunpack.c.l.b16 %v658
        %v698 = vunpack.c.l.b16 %v659
        %v699 = vunpack.c.l.b16 %v660
        %v700 = vunpack.c.l.b16 %v661
        %v701 = vunpack.c.l.b16 %v662
        %v702 = vunpack.c.l.b16 %v663
        %v703 = vunpack.c.l.b16 %v664
        %v704 = vunpack.c.l.b16 %v665
        %v705 = vunpack.c.l.b16 %v666
        %v706 = vunpack.c.l.b16 %v667
        %v707 = vpack.c.b16 %v692, %v691
        %v708 = vpack.c.b16 %v694, %v693
        %v709 = vpack.c.b16 %v696, %v695
        %v710 = vpack.c.b16 %v698, %v697
        %v711 = vpack.c.b16 %v700, %v699
        %v712 = vpack.c.b16 %v702, %v701
        %v713 = vpack.c.b16 %v704, %v703
        %v714 = vpack.c.b16 %v706, %v705
        %723 = vmatprep.subr.bf16.mxu0 0
        %724 = vmatpush1.bf16.msra.mxu0 %v714
        %725 = vmatprep.subr.bf16.mxu0 0
        %726 = vmatpush1.bf16.msra.mxu0 %v713
        %727 = vmatprep.subr.bf16.mxu0 0
        %728 = vmatpush1.bf16.msra.mxu0 %v712
        %729 = vmatprep.subr.bf16.mxu0 0
        %730 = vmatpush1.bf16.msra.mxu0 %v711
        %731 = vmatprep.subr.bf16.mxu0 0
        %732 = vmatpush1.bf16.msra.mxu0 %v710
        %733 = vmatprep.subr.bf16.mxu0 0
        %734 = vmatpush1.bf16.msra.mxu0 %v709
        %735 = vmatprep.subr.bf16.mxu0 0
        %736 = vmatpush1.bf16.msra.mxu0 %v708
        %737 = vmatprep.subr.bf16.mxu0 0
        %738 = vmatpush1.bf16.msra.mxu0 %v707
        %739 = vmatprep.subr.bf16.mxu0 0
        %740 = vmatpush2.bf16.msra.mxu0 0
        %741 = vmatprep.subr.bf16.mxu0 0
        %742 = vmatpush2.bf16.msra.mxu0 0
        %743 = vmatprep.subr.bf16.mxu0 0
        %744 = vmatpush2.bf16.msra.mxu0 0
        %745 = vmatprep.subr.bf16.mxu0 0
        %746 = vmatpush2.bf16.msra.mxu0 0
        %747 = vmatprep.subr.bf16.mxu0 0
        %748 = vmatpush2.bf16.msra.mxu0 0
        %749 = vmatprep.subr.bf16.mxu0 0
        %750 = vmatpush2.bf16.msra.mxu0 0
        %751 = vmatprep.subr.bf16.mxu0 0
        %752 = vmatpush2.bf16.msra.mxu0 0
        %753 = vmatprep.subr.bf16.mxu0 0
        %754 = vmatpush2.bf16.msra.mxu0 0
        %755 = vmatprep.mubr.bf16.mxu0 0
        %756 = vmatmul.mubr.bf16.gmra.mxu0 %v644
        %v757 = vpop.f32.mrf.mxu0
        %v758 = vadd.f32 %v673, %v757
        %v759 = vpop.f32.mrf.mxu0
        %v760 = vpop.f32.mrf.mxu0
        %v761 = vadd.f32 %v673, %v760
        %v762 = vpop.f32.mrf.mxu0
        %763 = vmatprep.mubr.bf16.mxu0 0
        %764 = vmatmul.mubr.bf16.gmra.mxu0 %v645
        %v765 = vpop.f32.mrf.mxu0
        %v766 = vadd.f32 %v673, %v765
        %v767 = vpop.f32.mrf.mxu0
        %v768 = vpop.f32.mrf.mxu0
        %v769 = vadd.f32 %v673, %v768
        %v770 = vpop.f32.mrf.mxu0
        %771 = vmatprep.mubr.bf16.mxu0 0
        %772 = vmatmul.mubr.bf16.gmra.mxu0 %v646
        %v773 = vpop.f32.mrf.mxu0
        %v774 = vadd.f32 %v673, %v773
        %v775 = vpop.f32.mrf.mxu0
        %v776 = vpop.f32.mrf.mxu0
        %v777 = vadd.f32 %v673, %v776
        %v778 = vpop.f32.mrf.mxu0
        %779 = vmatprep.mubr.bf16.mxu0 0
        %780 = vmatmul.mubr.bf16.gmra.mxu0 %v647
        %v781 = vpop.f32.mrf.mxu0
        %v782 = vadd.f32 %v673, %v781
        %v783 = vpop.f32.mrf.mxu0
        %v784 = vpop.f32.mrf.mxu0
        %v785 = vadd.f32 %v673, %v784
        %v786 = vpop.f32.mrf.mxu0
        %787 = vmatprep.mubr.bf16.mxu0 0
        %788 = vmatmul.mubr.bf16.gmra.mxu0 %v648
        %v789 = vpop.f32.mrf.mxu0
        %v790 = vadd.f32 %v673, %v789
        %v791 = vpop.f32.mrf.mxu0
        %v792 = vpop.f32.mrf.mxu0
        %v793 = vadd.f32 %v673, %v792
        %v794 = vpop.f32.mrf.mxu0
        %795 = vmatprep.mubr.bf16.mxu0 0
        %796 = vmatmul.mubr.bf16.gmra.mxu0 %v649
        %v797 = vpop.f32.mrf.mxu0
        %v798 = vadd.f32 %v673, %v797
        %v799 = vpop.f32.mrf.mxu0
        %v800 = vpop.f32.mrf.mxu0
        %v801 = vadd.f32 %v673, %v800
        %v802 = vpop.f32.mrf.mxu0
        %803 = vmatprep.mubr.bf16.mxu0 0
        %804 = vmatmul.mubr.bf16.gmra.mxu0 %v650
        %v805 = vpop.f32.mrf.mxu0
        %v806 = vadd.f32 %v673, %v805
        %v807 = vpop.f32.mrf.mxu0
        %v808 = vpop.f32.mrf.mxu0
        %v809 = vadd.f32 %v673, %v808
        %v810 = vpop.f32.mrf.mxu0
        %811 = vmatprep.mubr.bf16.mxu0 0
        %812 = vmatmul.mubr.bf16.gmra.mxu0 %v651
        %v813 = vpop.f32.mrf.mxu0
        %v814 = vadd.f32 %v673, %v813
        %v815 = vpop.f32.mrf.mxu0
        %v816 = vpop.f32.mrf.mxu0
        %v817 = vadd.f32 %v673, %v816
        %v818 = vpop.f32.mrf.mxu0
        %819 = vdwg.mxu0
        %v820 = vtanh.pop %v758
        %v821 = vtanh.pop %v761
        %v822 = vtanh.pop %v766
        %v823 = vtanh.pop %v769
        %v824 = vtanh.pop %v774
        %v825 = vtanh.pop %v777
        %v826 = vtanh.pop %v782
        %v827 = vtanh.pop %v785
        %v828 = vtanh.pop %v790
        %v829 = vtanh.pop %v793
        %v830 = vtanh.pop %v798
        %v831 = vtanh.pop %v801
        %v832 = vtanh.pop %v806
        %v833 = vtanh.pop %v809
        %v834 = vtanh.pop %v814
        %v835 = vtanh.pop %v817
        %v836 = vld [vmem:[%s326] sm:$0xff]
        %v837 = vcvt.s32.f32 %v836
        %v839 = vcombine.high %v837, %v837
        %v841 = vunpack.c.l.s4 1966171168
        %v842 = vunpack.c.0.s8 %v841
        %v843 = vlaneseq
        %v844 = vshrl.u32 %v843, 7
        %v845 = vsub.s32 %v842, %v844
        %v846 = vrot.slane %v837, %v845
        %v848 = vunpack.c.l.s4 1966171168
        %v849 = vunpack.c.0.s8 %v848
        %v850 = vlaneseq
        %v851 = vshrl.u32 %v850, 7
        %v852 = vsub.s32 %v849, %v851
        %v853 = vrot.slane %v839, %v852
        %v854 = vcombine.high %v846, %v846
        %v855 = vcombine.high %v853, %v853
        %v857 = vunpack.c.l.s4 1966171168
        %v858 = vunpack.c.0.s8 %v857
        %v859 = vlaneseq
        %v860 = vshrl.u32 %v859, 7
        %v861 = vsub.s32 %v858, %v860
        %v862 = vrot.slane %v846, %v861
        %v864 = vunpack.c.l.s4 1966171168
        %v865 = vunpack.c.0.s8 %v864
        %v866 = vlaneseq
        %v867 = vshrl.u32 %v866, 7
        %v868 = vsub.s32 %v865, %v867
        %v869 = vrot.slane %v853, %v868
        %v871 = vunpack.c.l.s4 1966171168
        %v872 = vunpack.c.0.s8 %v871
        %v873 = vlaneseq
        %v874 = vshrl.u32 %v873, 7
        %v875 = vsub.s32 %v872, %v874
        %v876 = vrot.slane %v854, %v875
        %v878 = vunpack.c.l.s4 1966171168
        %v879 = vunpack.c.0.s8 %v878
        %v880 = vlaneseq
        %v881 = vshrl.u32 %v880, 7
        %v882 = vsub.s32 %v879, %v881
        %v883 = vrot.slane %v855, %v882
        %v884 = vcombine.high %v862, %v862
        %v885 = vcombine.high %v869, %v869
        %v886 = vcombine.high %v876, %v876
        %v887 = vcombine.high %v883, %v883
        %vm888 = vcmask 130048
        %v889 = vsel %vm888, %v862, 0
        %891 = vmatprep.subr.mxu0 0.0
        %892 = vmatpush1.msra.mxu0 0.0
        %893 = vmatprep.subr.mxu0 0.0
        %894 = vmatpush1.msra.mxu0 0.0
        %895 = vmatprep.subr.mxu0 0.0
        %896 = vmatpush1.msra.mxu0 0.0
        %897 = vmatprep.subr.mxu0 0.0
        %898 = vmatpush1.msra.mxu0 0.0
        %899 = vmatprep.subr.mxu0 0.0
        %900 = vmatpush1.msra.mxu0 0.0
        %901 = vmatprep.subr.mxu0 0.0
        %902 = vmatpush1.msra.mxu0 0.0
        %903 = vmatprep.subr.mxu0 0.0
        %904 = vmatpush1.msra.mxu0 0.0
        %905 = vmatprep.subr.mxu0 0.0
        %906 = vmatpush1.msra.mxu0 0.0
        %907 = vmatprep.subr.mxu0 0.0
        %908 = vmatpush1.msra.mxu0 0.0
        %909 = vmatprep.subr.mxu0 0.0
        %910 = vmatpush1.msra.mxu0 0.0
        %911 = vmatprep.subr.mxu0 0.0
        %912 = vmatpush1.msra.mxu0 0.0
        %913 = vmatprep.subr.mxu0 0.0
        %914 = vmatpush1.msra.mxu0 0.0
        %915 = vmatprep.subr.mxu0 0.0
        %916 = vmatpush1.msra.mxu0 0.0
        %917 = vmatprep.subr.mxu0 0.0
        %918 = vmatpush1.msra.mxu0 0.0
        %919 = vmatprep.subr.mxu0 0.0
        %920 = vmatpush1.msra.mxu0 %v821
        %921 = vmatprep.subr.mxu0 0.0
        %922 = vmatpush1.msra.mxu0 %v820
        %923 = vmatprep.subr.mxu0 0.0
        %924 = vmatpush2.msra.mxu0 0.0
        %925 = vmatprep.subr.mxu0 0.0
        %926 = vmatpush2.msra.mxu0 0.0
        %927 = vmatprep.subr.mxu0 0.0
        %928 = vmatpush2.msra.mxu0 0.0
        %929 = vmatprep.subr.mxu0 0.0
        %930 = vmatpush2.msra.mxu0 0.0
        %931 = vmatprep.subr.mxu0 0.0
        %932 = vmatpush2.msra.mxu0 0.0
        %933 = vmatprep.subr.mxu0 0.0
        %934 = vmatpush2.msra.mxu0 0.0
        %935 = vmatprep.subr.mxu0 0.0
        %936 = vmatpush2.msra.mxu0 0.0
        %937 = vmatprep.subr.mxu0 0.0
        %938 = vmatpush2.msra.mxu0 0.0
        %939 = vmatprep.subr.mxu0 0.0
        %940 = vmatpush2.msra.mxu0 0.0
        %941 = vmatprep.subr.mxu0 0.0
        %942 = vmatpush2.msra.mxu0 0.0
        %943 = vmatprep.subr.mxu0 0.0
        %944 = vmatpush2.msra.mxu0 0.0
        %945 = vmatprep.subr.mxu0 0.0
        %946 = vmatpush2.msra.mxu0 0.0
        %947 = vmatprep.subr.mxu0 0.0
        %948 = vmatpush2.msra.mxu0 0.0
        %949 = vmatprep.subr.mxu0 0.0
        %950 = vmatpush2.msra.mxu0 0.0
        %951 = vmatprep.subr.mxu0 0.0
        %952 = vmatpush2.msra.mxu0 0.0
        %953 = vmatprep.subr.mxu0 0.0
        %954 = vmatpush2.msra.mxu0 0.0
        %955 = vmatprep.mubr.f32.mxu0 0.0
        %956 = vmatmul.mubr.f32.gmra.mxu0 %v889
        %v957 = vpop.f32.mrf.mxu0
        %v958 = vadd.f32 0.0, %v957
        %v959 = vpop.f32.mrf.mxu0
        %960 = vdwg.mxu0
        %v961 = vsel %vm888, %v876, 0
        %963 = vmatprep.subr.mxu0 0.0
        %964 = vmatpush1.msra.mxu0 0.0
        %965 = vmatprep.subr.mxu0 0.0
        %966 = vmatpush1.msra.mxu0 0.0
        %967 = vmatprep.subr.mxu0 0.0
        %968 = vmatpush1.msra.mxu0 0.0
        %969 = vmatprep.subr.mxu0 0.0
        %970 = vmatpush1.msra.mxu0 0.0
        %971 = vmatprep.subr.mxu0 0.0
        %972 = vmatpush1.msra.mxu0 0.0
        %973 = vmatprep.subr.mxu0 0.0
        %974 = vmatpush1.msra.mxu0 0.0
        %975 = vmatprep.subr.mxu0 0.0
        %976 = vmatpush1.msra.mxu0 0.0
        %977 = vmatprep.subr.mxu0 0.0
        %978 = vmatpush1.msra.mxu0 0.0
        %979 = vmatprep.subr.mxu0 0.0
        %980 = vmatpush1.msra.mxu0 0.0
        %981 = vmatprep.subr.mxu0 0.0
        %982 = vmatpush1.msra.mxu0 0.0
        %983 = vmatprep.subr.mxu0 0.0
        %984 = vmatpush1.msra.mxu0 0.0
        %985 = vmatprep.subr.mxu0 0.0
        %986 = vmatpush1.msra.mxu0 0.0
        %987 = vmatprep.subr.mxu0 0.0
        %988 = vmatpush1.msra.mxu0 0.0
        %989 = vmatprep.subr.mxu0 0.0
        %990 = vmatpush1.msra.mxu0 0.0
        %991 = vmatprep.subr.mxu0 0.0
        %992 = vmatpush1.msra.mxu0 %v823
        %993 = vmatprep.subr.mxu0 0.0
        %994 = vmatpush1.msra.mxu0 %v822
        %995 = vmatprep.subr.mxu0 0.0
        %996 = vmatpush2.msra.mxu0 0.0
        %997 = vmatprep.subr.mxu0 0.0
        %998 = vmatpush2.msra.mxu0 0.0
        %999 = vmatprep.subr.mxu0 0.0
        %1000 = vmatpush2.msra.mxu0 0.0
        %1001 = vmatprep.subr.mxu0 0.0
        %1002 = vmatpush2.msra.mxu0 0.0
        %1003 = vmatprep.subr.mxu0 0.0
        %1004 = vmatpush2.msra.mxu0 0.0
        %1005 = vmatprep.subr.mxu0 0.0
        %1006 = vmatpush2.msra.mxu0 0.0
        %1007 = vmatprep.subr.mxu0 0.0
        %1008 = vmatpush2.msra.mxu0 0.0
        %1009 = vmatprep.subr.mxu0 0.0
        %1010 = vmatpush2.msra.mxu0 0.0
        %1011 = vmatprep.subr.mxu0 0.0
        %1012 = vmatpush2.msra.mxu0 0.0
        %1013 = vmatprep.subr.mxu0 0.0
        %1014 = vmatpush2.msra.mxu0 0.0
        %1015 = vmatprep.subr.mxu0 0.0
        %1016 = vmatpush2.msra.mxu0 0.0
        %1017 = vmatprep.subr.mxu0 0.0
        %1018 = vmatpush2.msra.mxu0 0.0
        %1019 = vmatprep.subr.mxu0 0.0
        %1020 = vmatpush2.msra.mxu0 0.0
        %1021 = vmatprep.subr.mxu0 0.0
        %1022 = vmatpush2.msra.mxu0 0.0
        %1023 = vmatprep.subr.mxu0 0.0
        %1024 = vmatpush2.msra.mxu0 0.0
        %1025 = vmatprep.subr.mxu0 0.0
        %1026 = vmatpush2.msra.mxu0 0.0
        %1027 = vmatprep.mubr.f32.mxu0 0.0
        %1028 = vmatmul.mubr.f32.gmra.mxu0 %v961
        %v1029 = vpop.f32.mrf.mxu0
        %v1030 = vadd.f32 0.0, %v1029
        %v1031 = vpop.f32.mrf.mxu0
        %1032 = vdwg.mxu0
        %v1033 = vsel %vm888, %v884, 0
        %1035 = vmatprep.subr.mxu0 0.0
        %1036 = vmatpush1.msra.mxu0 0.0
        %1037 = vmatprep.subr.mxu0 0.0
        %1038 = vmatpush1.msra.mxu0 0.0
        %1039 = vmatprep.subr.mxu0 0.0
        %1040 = vmatpush1.msra.mxu0 0.0
        %1041 = vmatprep.subr.mxu0 0.0
        %1042 = vmatpush1.msra.mxu0 0.0
        %1043 = vmatprep.subr.mxu0 0.0
        %1044 = vmatpush1.msra.mxu0 0.0
        %1045 = vmatprep.subr.mxu0 0.0
        %1046 = vmatpush1.msra.mxu0 0.0
        %1047 = vmatprep.subr.mxu0 0.0
        %1048 = vmatpush1.msra.mxu0 0.0
        %1049 = vmatprep.subr.mxu0 0.0
        %1050 = vmatpush1.msra.mxu0 0.0
        %1051 = vmatprep.subr.mxu0 0.0
        %1052 = vmatpush1.msra.mxu0 0.0
        %1053 = vmatprep.subr.mxu0 0.0
        %1054 = vmatpush1.msra.mxu0 0.0
        %1055 = vmatprep.subr.mxu0 0.0
        %1056 = vmatpush1.msra.mxu0 0.0
        %1057 = vmatprep.subr.mxu0 0.0
        %1058 = vmatpush1.msra.mxu0 0.0
        %1059 = vmatprep.subr.mxu0 0.0
        %1060 = vmatpush1.msra.mxu0 0.0
        %1061 = vmatprep.subr.mxu0 0.0
        %1062 = vmatpush1.msra.mxu0 0.0
        %1063 = vmatprep.subr.mxu0 0.0
        %1064 = vmatpush1.msra.mxu0 %v825
        %1065 = vmatprep.subr.mxu0 0.0
        %1066 = vmatpush1.msra.mxu0 %v824
        %1067 = vmatprep.subr.mxu0 0.0
        %1068 = vmatpush2.msra.mxu0 0.0
        %1069 = vmatprep.subr.mxu0 0.0
        %1070 = vmatpush2.msra.mxu0 0.0
        %1071 = vmatprep.subr.mxu0 0.0
        %1072 = vmatpush2.msra.mxu0 0.0
        %1073 = vmatprep.subr.mxu0 0.0
        %1074 = vmatpush2.msra.mxu0 0.0
        %1075 = vmatprep.subr.mxu0 0.0
        %1076 = vmatpush2.msra.mxu0 0.0
        %1077 = vmatprep.subr.mxu0 0.0
        %1078 = vmatpush2.msra.mxu0 0.0
        %1079 = vmatprep.subr.mxu0 0.0
        %1080 = vmatpush2.msra.mxu0 0.0
        %1081 = vmatprep.subr.mxu0 0.0
        %1082 = vmatpush2.msra.mxu0 0.0
        %1083 = vmatprep.subr.mxu0 0.0
        %1084 = vmatpush2.msra.mxu0 0.0
        %1085 = vmatprep.subr.mxu0 0.0
        %1086 = vmatpush2.msra.mxu0 0.0
        %1087 = vmatprep.subr.mxu0 0.0
        %1088 = vmatpush2.msra.mxu0 0.0
        %1089 = vmatprep.subr.mxu0 0.0
        %1090 = vmatpush2.msra.mxu0 0.0
        %1091 = vmatprep.subr.mxu0 0.0
        %1092 = vmatpush2.msra.mxu0 0.0
        %1093 = vmatprep.subr.mxu0 0.0
        %1094 = vmatpush2.msra.mxu0 0.0
        %1095 = vmatprep.subr.mxu0 0.0
        %1096 = vmatpush2.msra.mxu0 0.0
        %1097 = vmatprep.subr.mxu0 0.0
        %1098 = vmatpush2.msra.mxu0 0.0
        %1099 = vmatprep.mubr.f32.mxu0 0.0
        %1100 = vmatmul.mubr.f32.gmra.mxu0 %v1033
        %v1101 = vpop.f32.mrf.mxu0
        %v1102 = vadd.f32 0.0, %v1101
        %v1103 = vpop.f32.mrf.mxu0
        %1104 = vdwg.mxu0
        %v1105 = vsel %vm888, %v886, 0
        %1107 = vmatprep.subr.mxu0 0.0
        %1108 = vmatpush1.msra.mxu0 0.0
        %1109 = vmatprep.subr.mxu0 0.0
        %1110 = vmatpush1.msra.mxu0 0.0
        %1111 = vmatprep.subr.mxu0 0.0
        %1112 = vmatpush1.msra.mxu0 0.0
        %1113 = vmatprep.subr.mxu0 0.0
        %1114 = vmatpush1.msra.mxu0 0.0
        %1115 = vmatprep.subr.mxu0 0.0
        %1116 = vmatpush1.msra.mxu0 0.0
        %1117 = vmatprep.subr.mxu0 0.0
        %1118 = vmatpush1.msra.mxu0 0.0
        %1119 = vmatprep.subr.mxu0 0.0
        %1120 = vmatpush1.msra.mxu0 0.0
        %1121 = vmatprep.subr.mxu0 0.0
        %1122 = vmatpush1.msra.mxu0 0.0
        %1123 = vmatprep.subr.mxu0 0.0
        %1124 = vmatpush1.msra.mxu0 0.0
        %1125 = vmatprep.subr.mxu0 0.0
        %1126 = vmatpush1.msra.mxu0 0.0
        %1127 = vmatprep.subr.mxu0 0.0
        %1128 = vmatpush1.msra.mxu0 0.0
        %1129 = vmatprep.subr.mxu0 0.0
        %1130 = vmatpush1.msra.mxu0 0.0
        %1131 = vmatprep.subr.mxu0 0.0
        %1132 = vmatpush1.msra.mxu0 0.0
        %1133 = vmatprep.subr.mxu0 0.0
        %1134 = vmatpush1.msra.mxu0 0.0
        %1135 = vmatprep.subr.mxu0 0.0
        %1136 = vmatpush1.msra.mxu0 %v827
        %1137 = vmatprep.subr.mxu0 0.0
        %1138 = vmatpush1.msra.mxu0 %v826
        %1139 = vmatprep.subr.mxu0 0.0
        %1140 = vmatpush2.msra.mxu0 0.0
        %1141 = vmatprep.subr.mxu0 0.0
        %1142 = vmatpush2.msra.mxu0 0.0
        %1143 = vmatprep.subr.mxu0 0.0
        %1144 = vmatpush2.msra.mxu0 0.0
        %1145 = vmatprep.subr.mxu0 0.0
        %1146 = vmatpush2.msra.mxu0 0.0
        %1147 = vmatprep.subr.mxu0 0.0
        %1148 = vmatpush2.msra.mxu0 0.0
        %1149 = vmatprep.subr.mxu0 0.0
        %1150 = vmatpush2.msra.mxu0 0.0
        %1151 = vmatprep.subr.mxu0 0.0
        %1152 = vmatpush2.msra.mxu0 0.0
        %1153 = vmatprep.subr.mxu0 0.0
        %1154 = vmatpush2.msra.mxu0 0.0
        %1155 = vmatprep.subr.mxu0 0.0
        %1156 = vmatpush2.msra.mxu0 0.0
        %1157 = vmatprep.subr.mxu0 0.0
        %1158 = vmatpush2.msra.mxu0 0.0
        %1159 = vmatprep.subr.mxu0 0.0
        %1160 = vmatpush2.msra.mxu0 0.0
        %1161 = vmatprep.subr.mxu0 0.0
        %1162 = vmatpush2.msra.mxu0 0.0
        %1163 = vmatprep.subr.mxu0 0.0
        %1164 = vmatpush2.msra.mxu0 0.0
        %1165 = vmatprep.subr.mxu0 0.0
        %1166 = vmatpush2.msra.mxu0 0.0
        %1167 = vmatprep.subr.mxu0 0.0
        %1168 = vmatpush2.msra.mxu0 0.0
        %1169 = vmatprep.subr.mxu0 0.0
        %1170 = vmatpush2.msra.mxu0 0.0
        %1171 = vmatprep.mubr.f32.mxu0 0.0
        %1172 = vmatmul.mubr.f32.gmra.mxu0 %v1105
        %v1173 = vpop.f32.mrf.mxu0
        %v1174 = vadd.f32 0.0, %v1173
        %v1175 = vpop.f32.mrf.mxu0
        %1176 = vdwg.mxu0
        %v1177 = vsel %vm888, %v869, 0
        %1179 = vmatprep.subr.mxu0 0.0
        %1180 = vmatpush1.msra.mxu0 0.0
        %1181 = vmatprep.subr.mxu0 0.0
        %1182 = vmatpush1.msra.mxu0 0.0
        %1183 = vmatprep.subr.mxu0 0.0
        %1184 = vmatpush1.msra.mxu0 0.0
        %1185 = vmatprep.subr.mxu0 0.0
        %1186 = vmatpush1.msra.mxu0 0.0
        %1187 = vmatprep.subr.mxu0 0.0
        %1188 = vmatpush1.msra.mxu0 0.0
        %1189 = vmatprep.subr.mxu0 0.0
        %1190 = vmatpush1.msra.mxu0 0.0
        %1191 = vmatprep.subr.mxu0 0.0
        %1192 = vmatpush1.msra.mxu0 0.0
        %1193 = vmatprep.subr.mxu0 0.0
        %1194 = vmatpush1.msra.mxu0 0.0
        %1195 = vmatprep.subr.mxu0 0.0
        %1196 = vmatpush1.msra.mxu0 0.0
        %1197 = vmatprep.subr.mxu0 0.0
        %1198 = vmatpush1.msra.mxu0 0.0
        %1199 = vmatprep.subr.mxu0 0.0
        %1200 = vmatpush1.msra.mxu0 0.0
        %1201 = vmatprep.subr.mxu0 0.0
        %1202 = vmatpush1.msra.mxu0 0.0
        %1203 = vmatprep.subr.mxu0 0.0
        %1204 = vmatpush1.msra.mxu0 0.0
        %1205 = vmatprep.subr.mxu0 0.0
        %1206 = vmatpush1.msra.mxu0 0.0
        %1207 = vmatprep.subr.mxu0 0.0
        %1208 = vmatpush1.msra.mxu0 %v829
        %1209 = vmatprep.subr.mxu0 0.0
        %1210 = vmatpush1.msra.mxu0 %v828
        %1211 = vmatprep.subr.mxu0 0.0
        %1212 = vmatpush2.msra.mxu0 0.0
        %1213 = vmatprep.subr.mxu0 0.0
        %1214 = vmatpush2.msra.mxu0 0.0
        %1215 = vmatprep.subr.mxu0 0.0
        %1216 = vmatpush2.msra.mxu0 0.0
        %1217 = vmatprep.subr.mxu0 0.0
        %1218 = vmatpush2.msra.mxu0 0.0
        %1219 = vmatprep.subr.mxu0 0.0
        %1220 = vmatpush2.msra.mxu0 0.0
        %1221 = vmatprep.subr.mxu0 0.0
        %1222 = vmatpush2.msra.mxu0 0.0
        %1223 = vmatprep.subr.mxu0 0.0
        %1224 = vmatpush2.msra.mxu0 0.0
        %1225 = vmatprep.subr.mxu0 0.0
        %1226 = vmatpush2.msra.mxu0 0.0
        %1227 = vmatprep.subr.mxu0 0.0
        %1228 = vmatpush2.msra.mxu0 0.0
        %1229 = vmatprep.subr.mxu0 0.0
        %1230 = vmatpush2.msra.mxu0 0.0
        %1231 = vmatprep.subr.mxu0 0.0
        %1232 = vmatpush2.msra.mxu0 0.0
        %1233 = vmatprep.subr.mxu0 0.0
        %1234 = vmatpush2.msra.mxu0 0.0
        %1235 = vmatprep.subr.mxu0 0.0
        %1236 = vmatpush2.msra.mxu0 0.0
        %1237 = vmatprep.subr.mxu0 0.0
        %1238 = vmatpush2.msra.mxu0 0.0
        %1239 = vmatprep.subr.mxu0 0.0
        %1240 = vmatpush2.msra.mxu0 0.0
        %1241 = vmatprep.subr.mxu0 0.0
        %1242 = vmatpush2.msra.mxu0 0.0
        %1243 = vmatprep.mubr.f32.mxu0 0.0
        %1244 = vmatmul.mubr.f32.gmra.mxu0 %v1177
        %v1245 = vpop.f32.mrf.mxu0
        %v1246 = vadd.f32 0.0, %v1245
        %v1247 = vpop.f32.mrf.mxu0
        %1248 = vdwg.mxu0
        %v1249 = vsel %vm888, %v883, 0
        %1251 = vmatprep.subr.mxu0 0.0
        %1252 = vmatpush1.msra.mxu0 0.0
        %1253 = vmatprep.subr.mxu0 0.0
        %1254 = vmatpush1.msra.mxu0 0.0
        %1255 = vmatprep.subr.mxu0 0.0
        %1256 = vmatpush1.msra.mxu0 0.0
        %1257 = vmatprep.subr.mxu0 0.0
        %1258 = vmatpush1.msra.mxu0 0.0
        %1259 = vmatprep.subr.mxu0 0.0
        %1260 = vmatpush1.msra.mxu0 0.0
        %1261 = vmatprep.subr.mxu0 0.0
        %1262 = vmatpush1.msra.mxu0 0.0
        %1263 = vmatprep.subr.mxu0 0.0
        %1264 = vmatpush1.msra.mxu0 0.0
        %1265 = vmatprep.subr.mxu0 0.0
        %1266 = vmatpush1.msra.mxu0 0.0
        %1267 = vmatprep.subr.mxu0 0.0
        %1268 = vmatpush1.msra.mxu0 0.0
        %1269 = vmatprep.subr.mxu0 0.0
        %1270 = vmatpush1.msra.mxu0 0.0
        %1271 = vmatprep.subr.mxu0 0.0
        %1272 = vmatpush1.msra.mxu0 0.0
        %1273 = vmatprep.subr.mxu0 0.0
        %1274 = vmatpush1.msra.mxu0 0.0
        %1275 = vmatprep.subr.mxu0 0.0
        %1276 = vmatpush1.msra.mxu0 0.0
        %1277 = vmatprep.subr.mxu0 0.0
        %1278 = vmatpush1.msra.mxu0 0.0
        %1279 = vmatprep.subr.mxu0 0.0
        %1280 = vmatpush1.msra.mxu0 %v831
        %1281 = vmatprep.subr.mxu0 0.0
        %1282 = vmatpush1.msra.mxu0 %v830
        %1283 = vmatprep.subr.mxu0 0.0
        %1284 = vmatpush2.msra.mxu0 0.0
        %1285 = vmatprep.subr.mxu0 0.0
        %1286 = vmatpush2.msra.mxu0 0.0
        %1287 = vmatprep.subr.mxu0 0.0
        %1288 = vmatpush2.msra.mxu0 0.0
        %1289 = vmatprep.subr.mxu0 0.0
        %1290 = vmatpush2.msra.mxu0 0.0
        %1291 = vmatprep.subr.mxu0 0.0
        %1292 = vmatpush2.msra.mxu0 0.0
        %1293 = vmatprep.subr.mxu0 0.0
        %1294 = vmatpush2.msra.mxu0 0.0
        %1295 = vmatprep.subr.mxu0 0.0
        %1296 = vmatpush2.msra.mxu0 0.0
        %1297 = vmatprep.subr.mxu0 0.0
        %1298 = vmatpush2.msra.mxu0 0.0
        %1299 = vmatprep.subr.mxu0 0.0
        %1300 = vmatpush2.msra.mxu0 0.0
        %1301 = vmatprep.subr.mxu0 0.0
        %1302 = vmatpush2.msra.mxu0 0.0
        %1303 = vmatprep.subr.mxu0 0.0
        %1304 = vmatpush2.msra.mxu0 0.0
        %1305 = vmatprep.subr.mxu0 0.0
        %1306 = vmatpush2.msra.mxu0 0.0
        %1307 = vmatprep.subr.mxu0 0.0
        %1308 = vmatpush2.msra.mxu0 0.0
        %1309 = vmatprep.subr.mxu0 0.0
        %1310 = vmatpush2.msra.mxu0 0.0
        %1311 = vmatprep.subr.mxu0 0.0
        %1312 = vmatpush2.msra.mxu0 0.0
        %1313 = vmatprep.subr.mxu0 0.0
        %1314 = vmatpush2.msra.mxu0 0.0
        %1315 = vmatprep.mubr.f32.mxu0 0.0
        %1316 = vmatmul.mubr.f32.gmra.mxu0 %v1249
        %v1317 = vpop.f32.mrf.mxu0
        %v1318 = vadd.f32 0.0, %v1317
        %v1319 = vpop.f32.mrf.mxu0
        %1320 = vdwg.mxu0
        %v1321 = vsel %vm888, %v885, 0
        %1323 = vmatprep.subr.mxu0 0.0
        %1324 = vmatpush1.msra.mxu0 0.0
        %1325 = vmatprep.subr.mxu0 0.0
        %1326 = vmatpush1.msra.mxu0 0.0
        %1327 = vmatprep.subr.mxu0 0.0
        %1328 = vmatpush1.msra.mxu0 0.0
        %1329 = vmatprep.subr.mxu0 0.0
        %1330 = vmatpush1.msra.mxu0 0.0
        %1331 = vmatprep.subr.mxu0 0.0
        %1332 = vmatpush1.msra.mxu0 0.0
        %1333 = vmatprep.subr.mxu0 0.0
        %1334 = vmatpush1.msra.mxu0 0.0
        %1335 = vmatprep.subr.mxu0 0.0
        %1336 = vmatpush1.msra.mxu0 0.0
        %1337 = vmatprep.subr.mxu0 0.0
        %1338 = vmatpush1.msra.mxu0 0.0
        %1339 = vmatprep.subr.mxu0 0.0
        %1340 = vmatpush1.msra.mxu0 0.0
        %1341 = vmatprep.subr.mxu0 0.0
        %1342 = vmatpush1.msra.mxu0 0.0
        %1343 = vmatprep.subr.mxu0 0.0
        %1344 = vmatpush1.msra.mxu0 0.0
        %1345 = vmatprep.subr.mxu0 0.0
        %1346 = vmatpush1.msra.mxu0 0.0
        %1347 = vmatprep.subr.mxu0 0.0
        %1348 = vmatpush1.msra.mxu0 0.0
        %1349 = vmatprep.subr.mxu0 0.0
        %1350 = vmatpush1.msra.mxu0 0.0
        %1351 = vmatprep.subr.mxu0 0.0
        %1352 = vmatpush1.msra.mxu0 %v833
        %1353 = vmatprep.subr.mxu0 0.0
        %1354 = vmatpush1.msra.mxu0 %v832
        %1355 = vmatprep.subr.mxu0 0.0
        %1356 = vmatpush2.msra.mxu0 0.0
        %1357 = vmatprep.subr.mxu0 0.0
        %1358 = vmatpush2.msra.mxu0 0.0
        %1359 = vmatprep.subr.mxu0 0.0
        %1360 = vmatpush2.msra.mxu0 0.0
        %1361 = vmatprep.subr.mxu0 0.0
        %1362 = vmatpush2.msra.mxu0 0.0
        %1363 = vmatprep.subr.mxu0 0.0
        %1364 = vmatpush2.msra.mxu0 0.0
        %1365 = vmatprep.subr.mxu0 0.0
        %1366 = vmatpush2.msra.mxu0 0.0
        %1367 = vmatprep.subr.mxu0 0.0
        %1368 = vmatpush2.msra.mxu0 0.0
        %1369 = vmatprep.subr.mxu0 0.0
        %1370 = vmatpush2.msra.mxu0 0.0
        %1371 = vmatprep.subr.mxu0 0.0
        %1372 = vmatpush2.msra.mxu0 0.0
        %1373 = vmatprep.subr.mxu0 0.0
        %1374 = vmatpush2.msra.mxu0 0.0
        %1375 = vmatprep.subr.mxu0 0.0
        %1376 = vmatpush2.msra.mxu0 0.0
        %1377 = vmatprep.subr.mxu0 0.0
        %1378 = vmatpush2.msra.mxu0 0.0
        %1379 = vmatprep.subr.mxu0 0.0
        %1380 = vmatpush2.msra.mxu0 0.0
        %1381 = vmatprep.subr.mxu0 0.0
        %1382 = vmatpush2.msra.mxu0 0.0
        %1383 = vmatprep.subr.mxu0 0.0
        %1384 = vmatpush2.msra.mxu0 0.0
        %1385 = vmatprep.subr.mxu0 0.0
        %1386 = vmatpush2.msra.mxu0 0.0
        %1387 = vmatprep.mubr.f32.mxu0 0.0
        %1388 = vmatmul.mubr.f32.gmra.mxu0 %v1321
        %v1389 = vpop.f32.mrf.mxu0
        %v1390 = vadd.f32 0.0, %v1389
        %v1391 = vpop.f32.mrf.mxu0
        %1392 = vdwg.mxu0
        %v1393 = vsel %vm888, %v887, 0
        %1395 = vmatprep.subr.mxu0 0.0
        %1396 = vmatpush1.msra.mxu0 0.0
        %1397 = vmatprep.subr.mxu0 0.0
        %1398 = vmatpush1.msra.mxu0 0.0
        %1399 = vmatprep.subr.mxu0 0.0
        %1400 = vmatpush1.msra.mxu0 0.0
        %1401 = vmatprep.subr.mxu0 0.0
        %1402 = vmatpush1.msra.mxu0 0.0
        %1403 = vmatprep.subr.mxu0 0.0
        %1404 = vmatpush1.msra.mxu0 0.0
        %1405 = vmatprep.subr.mxu0 0.0
        %1406 = vmatpush1.msra.mxu0 0.0
        %1407 = vmatprep.subr.mxu0 0.0
        %1408 = vmatpush1.msra.mxu0 0.0
        %1409 = vmatprep.subr.mxu0 0.0
        %1410 = vmatpush1.msra.mxu0 0.0
        %1411 = vmatprep.subr.mxu0 0.0
        %1412 = vmatpush1.msra.mxu0 0.0
        %1413 = vmatprep.subr.mxu0 0.0
        %1414 = vmatpush1.msra.mxu0 0.0
        %1415 = vmatprep.subr.mxu0 0.0
        %1416 = vmatpush1.msra.mxu0 0.0
        %1417 = vmatprep.subr.mxu0 0.0
        %1418 = vmatpush1.msra.mxu0 0.0
        %1419 = vmatprep.subr.mxu0 0.0
        %1420 = vmatpush1.msra.mxu0 0.0
        %1421 = vmatprep.subr.mxu0 0.0
        %1422 = vmatpush1.msra.mxu0 0.0
        %1423 = vmatprep.subr.mxu0 0.0
        %1424 = vmatpush1.msra.mxu0 %v835
        %1425 = vmatprep.subr.mxu0 0.0
        %1426 = vmatpush1.msra.mxu0 %v834
        %1427 = vmatprep.subr.mxu0 0.0
        %1428 = vmatpush2.msra.mxu0 0.0
        %1429 = vmatprep.subr.mxu0 0.0
        %1430 = vmatpush2.msra.mxu0 0.0
        %1431 = vmatprep.subr.mxu0 0.0
        %1432 = vmatpush2.msra.mxu0 0.0
        %1433 = vmatprep.subr.mxu0 0.0
        %1434 = vmatpush2.msra.mxu0 0.0
        %1435 = vmatprep.subr.mxu0 0.0
        %1436 = vmatpush2.msra.mxu0 0.0
        %1437 = vmatprep.subr.mxu0 0.0
        %1438 = vmatpush2.msra.mxu0 0.0
        %1439 = vmatprep.subr.mxu0 0.0
        %1440 = vmatpush2.msra.mxu0 0.0
        %1441 = vmatprep.subr.mxu0 0.0
        %1442 = vmatpush2.msra.mxu0 0.0
        %1443 = vmatprep.subr.mxu0 0.0
        %1444 = vmatpush2.msra.mxu0 0.0
        %1445 = vmatprep.subr.mxu0 0.0
        %1446 = vmatpush2.msra.mxu0 0.0
        %1447 = vmatprep.subr.mxu0 0.0
        %1448 = vmatpush2.msra.mxu0 0.0
        %1449 = vmatprep.subr.mxu0 0.0
        %1450 = vmatpush2.msra.mxu0 0.0
        %1451 = vmatprep.subr.mxu0 0.0
        %1452 = vmatpush2.msra.mxu0 0.0
        %1453 = vmatprep.subr.mxu0 0.0
        %1454 = vmatpush2.msra.mxu0 0.0
        %1455 = vmatprep.subr.mxu0 0.0
        %1456 = vmatpush2.msra.mxu0 0.0
        %1457 = vmatprep.subr.mxu0 0.0
        %1458 = vmatpush2.msra.mxu0 0.0
        %1459 = vmatprep.mubr.f32.mxu0 0.0
        %1460 = vmatmul.mubr.f32.gmra.mxu0 %v1393
        %v1461 = vpop.f32.mrf.mxu0
        %v1462 = vadd.f32 0.0, %v1461
        %v1463 = vpop.f32.mrf.mxu0
        %1464 = vdwg.mxu0
        %v1465 = vsel %vm888, %v837, 0.0
        %1466 = vadd.xlane.f32.xlu0 %v1465
        %v1467 = vpop.xlane.xlu0 %1466
        %v1468 = vmax.f32 %v1467, 1e-09
        %v1470 = vrot.slane %v1468, 1
        %v1471 = vrot.slane %v1468, 2
        %v1472 = vrot.slane %v1468, 3
        %v1473 = vrot.slane %v1468, 4
        %v1474 = vrot.slane %v1468, 5
        %v1475 = vrot.slane %v1468, 6
        %v1476 = vrot.slane %v1468, 7
        %v1485 = vrcp.pop %v1468
        %v1486 = vmul.f32 %v958, %v1485
        %v1487 = vrcp.pop %v1470
        %v1488 = vmul.f32 %v1030, %v1487
        %v1489 = vrcp.pop %v1471
        %v1490 = vmul.f32 %v1102, %v1489
        %v1491 = vrcp.pop %v1472
        %v1492 = vmul.f32 %v1174, %v1491
        %v1493 = vrcp.pop %v1473
        %v1494 = vmul.f32 %v1246, %v1493
        %v1495 = vrcp.pop %v1474
        %v1496 = vmul.f32 %v1318, %v1495
        %v1497 = vrcp.pop %v1475
        %v1498 = vmul.f32 %v1390, %v1497
        %v1499 = vrcp.pop %v1476
        %v1500 = vmul.f32 %v1462, %v1499
        %v1501 = vpack.c.bf16 %v1486, %v1486
        %v1502 = vpack.c.bf16 %v1488, %v1488
        %v1503 = vpack.c.bf16 %v1490, %v1490
        %v1504 = vpack.c.bf16 %v1492, %v1492
        %v1505 = vpack.c.bf16 %v1494, %v1494
        %v1506 = vpack.c.bf16 %v1496, %v1496
        %v1507 = vpack.c.bf16 %v1498, %v1498
        %v1508 = vpack.c.bf16 %v1500, %v1500
        %v1509 = vld [vmem:[#allocation10] sm:$0xf]
        %v1510 = vld [vmem:[#allocation10 + $0x4] sm:$0xf]
        %v1511 = vld [vmem:[#allocation10 + $0x8] sm:$0xf]
        %v1512 = vld [vmem:[#allocation10 + $0xc] sm:$0xf]
        %v1513 = vld [vmem:[#allocation10 + $0x10] sm:$0xf]
        %v1514 = vld [vmem:[#allocation10 + $0x14] sm:$0xf]
        %v1515 = vld [vmem:[#allocation10 + $0x18] sm:$0xf]
        %v1516 = vld [vmem:[#allocation10 + $0x1c] sm:$0xf]
        %v1517 = vld [vmem:[#allocation10 + $0x20] sm:$0xf]
        %v1518 = vld [vmem:[#allocation10 + $0x24] sm:$0xf]
        %v1519 = vld [vmem:[#allocation10 + $0x28] sm:$0xf]
        %v1520 = vld [vmem:[#allocation10 + $0x2c] sm:$0xf]
        %v1521 = vld [vmem:[#allocation10 + $0x30] sm:$0xf]
        %v1522 = vld [vmem:[#allocation10 + $0x34] sm:$0xf]
        %v1523 = vld [vmem:[#allocation10 + $0x38] sm:$0xf]
        %v1524 = vld [vmem:[#allocation10 + $0x3c] sm:$0xf]
        %v1525 = vld [vmem:[%s6] sm:$0x1]
        %v1527 = vlaneseq
        %v1528 = vshrl.u32 %v1527, 7
        %v1529 = vsub.s32 0, %v1528
        %v1530 = vrot.slane %v1525, %v1529
        %v1540 = vunpack.c.l.b16 %v1501
        %v1541 = vunpack.c.l.b16 %v1502
        %v1542 = vunpack.c.l.b16 %v1503
        %v1543 = vunpack.c.l.b16 %v1504
        %v1544 = vunpack.c.l.b16 %v1505
        %v1545 = vunpack.c.l.b16 %v1506
        %v1546 = vunpack.c.l.b16 %v1507
        %v1547 = vunpack.c.l.b16 %v1508
        %v1548 = vrot.slane %v1541, 7
        %vm1549 = vcmask 1041409
        %v1550 = vsel %vm1549, %v1548, %v1540
        %v1551 = vrot.slane %v1542, 6
        %vm1552 = vcmask 1042434
        %v1553 = vsel %vm1552, %v1551, %v1550
        %v1554 = vrot.slane %v1543, 5
        %vm1555 = vcmask 1043459
        %v1556 = vsel %vm1555, %v1554, %v1553
        %v1557 = vrot.slane %v1544, 4
        %vm1558 = vcmask 1044484
        %v1559 = vsel %vm1558, %v1557, %v1556
        %v1560 = vrot.slane %v1545, 3
        %vm1561 = vcmask 1045509
        %v1562 = vsel %vm1561, %v1560, %v1559
        %v1563 = vrot.slane %v1546, 2
        %vm1564 = vcmask 1046534
        %v1565 = vsel %vm1564, %v1563, %v1562
        %v1566 = vrot.slane %v1547, 1
        %vm1567 = vcmask 1047559
        %v1568 = vsel %vm1567, %v1566, %v1565
        %v1569 = vpack.c.b16 %v1568, %v1568
        %v1587 = vunpack.c.l.b16 %v1509
        %v1588 = vunpack.c.l.b16 %v1510
        %v1589 = vunpack.c.l.b16 %v1511
        %v1590 = vunpack.c.l.b16 %v1512
        %v1591 = vunpack.c.l.b16 %v1513
        %v1592 = vunpack.c.l.b16 %v1514
        %v1593 = vunpack.c.l.b16 %v1515
        %v1594 = vunpack.c.l.b16 %v1516
        %v1595 = vunpack.c.l.b16 %v1517
        %v1596 = vunpack.c.l.b16 %v1518
        %v1597 = vunpack.c.l.b16 %v1519
        %v1598 = vunpack.c.l.b16 %v1520
        %v1599 = vunpack.c.l.b16 %v1521
        %v1600 = vunpack.c.l.b16 %v1522
        %v1601 = vunpack.c.l.b16 %v1523
        %v1602 = vunpack.c.l.b16 %v1524
        %v1603 = vpack.c.b16 %v1588, %v1587
        %v1604 = vpack.c.b16 %v1590, %v1589
        %v1605 = vpack.c.b16 %v1592, %v1591
        %v1606 = vpack.c.b16 %v1594, %v1593
        %v1607 = vpack.c.b16 %v1596, %v1595
        %v1608 = vpack.c.b16 %v1598, %v1597
        %v1609 = vpack.c.b16 %v1600, %v1599
        %v1610 = vpack.c.b16 %v1602, %v1601
        %1619 = vmatprep.subr.bf16.mxu0 0
        %1620 = vmatpush1.bf16.msra.mxu0 %v1610
        %1621 = vmatprep.subr.bf16.mxu0 0
        %1622 = vmatpush1.bf16.msra.mxu0 %v1609
        %1623 = vmatprep.subr.bf16.mxu0 0
        %1624 = vmatpush1.bf16.msra.mxu0 %v1608
        %1625 = vmatprep.subr.bf16.mxu0 0
        %1626 = vmatpush1.bf16.msra.mxu0 %v1607
        %1627 = vmatprep.subr.bf16.mxu0 0
        %1628 = vmatpush1.bf16.msra.mxu0 %v1606
        %1629 = vmatprep.subr.bf16.mxu0 0
        %1630 = vmatpush1.bf16.msra.mxu0 %v1605
        %1631 = vmatprep.subr.bf16.mxu0 0
        %1632 = vmatpush1.bf16.msra.mxu0 %v1604
        %1633 = vmatprep.subr.bf16.mxu0 0
        %1634 = vmatpush1.bf16.msra.mxu0 %v1603
        %1635 = vmatprep.subr.bf16.mxu0 0
        %1636 = vmatpush2.bf16.msra.mxu0 0
        %1637 = vmatprep.subr.bf16.mxu0 0
        %1638 = vmatpush2.bf16.msra.mxu0 0
        %1639 = vmatprep.subr.bf16.mxu0 0
        %1640 = vmatpush2.bf16.msra.mxu0 0
        %1641 = vmatprep.subr.bf16.mxu0 0
        %1642 = vmatpush2.bf16.msra.mxu0 0
        %1643 = vmatprep.subr.bf16.mxu0 0
        %1644 = vmatpush2.bf16.msra.mxu0 0
        %1645 = vmatprep.subr.bf16.mxu0 0
        %1646 = vmatpush2.bf16.msra.mxu0 0
        %1647 = vmatprep.subr.bf16.mxu0 0
        %1648 = vmatpush2.bf16.msra.mxu0 0
        %1649 = vmatprep.subr.bf16.mxu0 0
        %1650 = vmatpush2.bf16.msra.mxu0 0
        %1651 = vmatprep.mubr.bf16.mxu0 0
        %1652 = vmatmul.mubr.bf16.gmra.mxu0 %v1569
        %v1653 = vpop.f32.mrf.mxu0
        %v1654 = vadd.f32 %v1530, %v1653
        %v1655 = vpop.f32.mrf.mxu0
        %v1656 = vpop.f32.mrf.mxu0
        %v1657 = vpop.f32.mrf.mxu0
        %1658 = vdwg.mxu0
        %1659 = vst [vmem:[%s373] sm:$0xff] %v1654
        %s1660 = sand.u32 %s193, 1
        %s1661 = scalar_lea.sflag [#allocation4], %s1660
        %s1662 = sand.u32 %s193, 1
        %s1663 = smul.addr %s1662, 8
        %s1664 = scalar_lea.vmem [#allocation11], %s1663
        // Predicated region
        $region69: #{tpu_custom_call.1} parent=47 // pred_check
          %p1665 = pneg %p203
        $region70: #{tpu_custom_call.1} parent=47 // pred_check_branch
          %1667 = sbr.rel (%p1665) target = $region72
        $region71: #{tpu_custom_call.1} parent=47 // pred_region
          %s1669 = ssub.s32 128, 128
          %1670 = vsyncadd %s1661, %s1669
          %s1671 = smul.addr %s28, 128
          %s1672 = scalar_lea.hbm %s7, %s1671
          %s1674 = sshll.u32 %s1664, 4
          %s1675 = int_to_ptr.vmem [resolvable:$true] %s1674
          %1677 = dma.vmem_to_hbm [thread:$0]  %s1675, 128, %s1672, %s1661
        $region72: #{tpu_custom_call.1} parent=47 // pred_fallthru
          _
      $region48: #{tpu_custom_call.1} parent=5 // pred_fallthru
        _
      %p1678 = scmp.le.s32.totalorder 2, %s23
      // Predicated region
      $region73: #{tpu_custom_call.1} parent=5 // pred_check
        %p1679 = pneg %p1678
      $region74: #{tpu_custom_call.1} parent=5 // pred_check_branch
        %1681 = sbr.rel (%p1679) target = $region76
      $region75: #{tpu_custom_call.1} parent=5 // pred_region
        %s1682 = ssub.s32 %s23, 2
        // Predicated region
        $region77: #{tpu_custom_call.1} parent=75 // pred_check
          %p1683 = pneg %p209
        $region78: #{tpu_custom_call.1} parent=75 // pred_check_branch
          %1685 = sbr.rel (%p1683) target = $region80
        $region79: #{tpu_custom_call.1} parent=75 // pred_region
          %s1686 = sand.u32 %s194, 1
          %s1687 = scalar_lea.sflag [#allocation4], %s1686
          %s1688 = sand.u32 %s194, 1
          %s1689 = smul.addr %s1688, 8
          %s1690 = scalar_lea.vmem [#allocation11], %s1689
          %1691 = dma.done %s1687, 128
        $region80: #{tpu_custom_call.1} parent=75 // pred_fallthru
          _
      $region76: #{tpu_custom_call.1} parent=5 // pred_fallthru
        _
    $region6: #{tpu_custom_call.1} parent=1 // loop_footer
      %s27 = sadd.s32 1, %s23
    $region7: #{tpu_custom_call.1} parent=1 // loop_footer_branch
      %22 = sbr.rel target = $region3
    $region8: #{tpu_custom_call.1} parent=1 // loop_exit
      _
    %1692 = vsyncpa [#allocation3], 1
    %s1693 = scalar_lea.sflag [#allocation3], 1
    %1694 = vsyncpa %s1693, 1
    %1695 = vsyncpa [#allocation6], 1
    %s1696 = scalar_lea.sflag [#allocation6], 1
    %1697 = vsyncpa %s1696, 1
    %1698 = vsyncpa [#allocation9], 1
    %1699 = vsyncpa [#allocation4], 1
    %s1700 = scalar_lea.sflag [#allocation4], 1
    %1701 = vsyncpa %s1700, 1

</llo_original>
